<compile_context>
chip_gen: v6e
topology: v6e:2x2x1
jax: 0.10.0
libtpu: 0.0.40
codegen_flags: <defaults>
</compile_context>

<pallas_src>
import jax
import jax.numpy as jnp
from jax.experimental import pallas as pl
from jax.experimental.pallas import tpu as pltpu

_LANE = 128
_ROW_TILE = 512                       # sublane rows / grid step (512*128 px)
_VMEM_LIMIT = 40 * 1024 * 1024        # need ~14 MiB; headroom on all parts
_SMOOTH = 1e-3


def _make_fused_kernel(P, R, C_NP, C_NC, needs_mask):
    """Fused NP + HV + NC loss-statistics kernel.

    Per grid step (n, ck, pt) the blocks are:
      logits  (1, C, R, 128)    targets (1, 1, R, 128) int32
      hv pair (1, 2, R, 128)
    Scratch holds per-lane partial sums; the final pixel tile of each (n, ck)
    does one sublane reduce and a lane-dense store of shape (.., C, 128).
    """

    def kernel(np_logits_ref, np_tgt_ref, hv_logits_ref, hv_tgt_ref,
               nc_logits_ref, nc_tgt_ref,
               np_out_ref, hv_out_ref, nc_out_ref,
               np_inter, np_psum, np_tsum, np_ce,
               nc_inter, nc_psum, nc_tsum, nc_ce, hv_acc):
        ck = pl.program_id(1)
        pt = pl.program_id(2)
        npt = pl.num_programs(2)

        @pl.when(pt == 0)
        def _init():
            for ref in (np_inter, np_psum, np_tsum, np_ce,
                        nc_inter, nc_psum, nc_tsum, nc_ce, hv_acc):
                ref[...] = jnp.zeros_like(ref)

        if needs_mask:
            # Valid-pixel mask: handles the pad-to-128 tail, ragged last row
            # tile, and chunk-overhang tiles re-read via the clamped index_map.
            rblk = ck * npt + pt
            row = jax.lax.broadcasted_iota(jnp.int32, (R, _LANE), 0) + rblk * R
            lane = jax.lax.broadcasted_iota(jnp.int32, (R, _LANE), 1)
            valid = (row * _LANE + lane) < P          # (R, 128) bool
        else:
            valid = None

        def cls_update(logits_ref, tgt_ref, inter, psum, tsum, ce, C):
            z = logits_ref[0].astype(jnp.float32)      # (C, R, 128)
            tgt = tgt_ref[0, 0]                        # (R, 128) int32
            m = jnp.max(z, axis=0, keepdims=True)      # elementwise over C
            zs = z - m
            ez = jnp.exp(zs)
            sez = jnp.sum(ez, axis=0, keepdims=True)
            probs = ez * pl.reciprocal(sez, approx=True)
            neg_logp = jnp.log(sez) - zs               # -log_softmax
            iota_c = jax.lax.broadcasted_iota(jnp.int32, (C, R, _LANE), 0)
            hit = iota_c == tgt[None]                  # scatter_ one-hot
            if valid is not None:
                hit = hit & valid[None]
                psum[...] += jnp.where(valid[None], probs, 0.0)
            else:
                psum[...] += probs                     # dice prediction sum
            inter[...] += jnp.where(hit, probs, 0.0)   # dice intersection
            tsum[...] += jnp.where(hit, 1.0, 0.0)      # dice target sum
            ce[...] += jnp.where(hit, neg_logp, 0.0)   # NLL at target class

        cls_update(np_logits_ref, np_tgt_ref,
                   np_inter, np_psum, np_tsum, np_ce, C_NP)
        cls_update(nc_logits_ref, nc_tgt_ref,
                   nc_inter, nc_psum, nc_tsum, nc_ce, C_NC)

        # HV branch: MSE(tanh(logits), targets) -- purely elementwise.
        d = (jnp.tanh(hv_logits_ref[0].astype(jnp.float32))
             - hv_tgt_ref[0].astype(jnp.float32))      # (2, R, 128)
        sq = d * d
        if valid is not None:
            sq = jnp.where(valid[None], sq, 0.0)
        hv_acc[...] += jnp.sum(sq, axis=0)

        @pl.when(pt == npt - 1)
        def _finalize():
            np_out_ref[0, 0, 0] = jnp.sum(np_inter[...], axis=1)
            np_out_ref[0, 0, 1] = jnp.sum(np_psum[...], axis=1)
            np_out_ref[0, 0, 2] = jnp.sum(np_tsum[...], axis=1)
            np_out_ref[0, 0, 3] = jnp.sum(np_ce[...], axis=1)
            nc_out_ref[0, 0, 0] = jnp.sum(nc_inter[...], axis=1)
            nc_out_ref[0, 0, 1] = jnp.sum(nc_psum[...], axis=1)
            nc_out_ref[0, 0, 2] = jnp.sum(nc_tsum[...], axis=1)
            nc_out_ref[0, 0, 3] = jnp.sum(nc_ce[...], axis=1)
            hv_out_ref[0, 0] = jnp.sum(hv_acc[...], axis=0, keepdims=True)

    return kernel


def _to_tiles(x, Ppad, rows):
    """(N, C, H, W) -> (N, C, rows, 128); copy only if H*W % 128 != 0."""
    N, C = x.shape[0], x.shape[1]
    P = x.shape[2] * x.shape[3]
    x = x.reshape(N, C, P)
    if Ppad != P:
        # TODO(synk): this pad is a full-tensor HBM copy; it is only taken
        # when H*W is not a multiple of 128 (all other raggedness is handled
        # by the in-kernel mask, so no pad to the tile size is ever needed).
        x = jnp.pad(x, ((0, 0), (0, 0), (0, Ppad - P)))
    return x.reshape(N, C, Ppad // _LANE, _LANE)


@jax.jit
def hover_loss(np_logits, np_targets, hv_logits, hv_targets,
               nc_logits, nc_targets):
    # Mirror the PyTorch module's shape asserts.
    assert np_targets.ndim == 3 and hv_targets.ndim == 4 and nc_targets.ndim == 3
    assert np_logits.ndim == 4 and hv_logits.ndim == 4 and nc_logits.ndim == 4
    assert (np_logits.shape[1] == 2 and hv_logits.shape[1] == 2
            and nc_logits.shape[1] == 5)

    N, _, H, W = np_logits.shape
    P = H * W
    Ppad = -(-P // _LANE) * _LANE
    rows = Ppad // _LANE

    # Row tiling: R rows of 128 pixels per grid step.
    if rows <= _ROW_TILE:
        R, RT = rows, 1
    else:
        R, RT = _ROW_TILE, -(-rows // _ROW_TILE)
    # v7x: keep both TensorCores busy when N == 1 by splitting the pixel axis
    # into CK parallel chunks with per-chunk partial statistics.
    CK = 2 if (N == 1 and RT >= 2) else 1
    PT = -(-RT // CK)
    needs_mask = (Ppad != P) or (CK * PT * R != rows)

    np_x = _to_tiles(np_logits, Ppad, rows)
    hv_x = _to_tiles(hv_logits, Ppad, rows)
    hv_t = _to_tiles(hv_targets, Ppad, rows)
    nc_x = _to_tiles(nc_logits, Ppad, rows)
    np_t = _to_tiles(np_targets.astype(jnp.int32)[:, None], Ppad, rows)
    nc_t = _to_tiles(nc_targets.astype(jnp.int32)[:, None], Ppad, rows)

    def in_map(n, ck, pt):
        rb = jnp.minimum(ck * PT + pt, RT - 1)   # clamp chunk overhang
        return (n, 0, rb, 0)

    def cls_spec(C):
        return pl.BlockSpec((1, C, R, _LANE), in_map)

    out_shape = (
        jax.ShapeDtypeStruct((N, CK, 4, 2, _LANE), jnp.float32),   # NP stats
        jax.ShapeDtypeStruct((N, CK, 1, _LANE), jnp.float32),      # HV sq-err
        jax.ShapeDtypeStruct((N, CK, 4, 5, _LANE), jnp.float32),   # NC stats
    )
    out_specs = (
        pl.BlockSpec((1, 1, 4, 2, _LANE), lambda n, ck, pt: (n, ck, 0, 0, 0)),
        pl.BlockSpec((1, 1, 1, _LANE), lambda n, ck, pt: (n, ck, 0, 0)),
        pl.BlockSpec((1, 1, 4, 5, _LANE), lambda n, ck, pt: (n, ck, 0, 0, 0)),
    )
    scratch = ([pltpu.VMEM((2, R, _LANE), jnp.float32) for _ in range(4)]
               + [pltpu.VMEM((5, R, _LANE), jnp.float32) for _ in range(4)]
               + [pltpu.VMEM((R, _LANE), jnp.float32)])

    in_bytes = sum(int(a.size) * a.dtype.itemsize
                   for a in (np_x, np_t, hv_x, hv_t, nc_x, nc_t))
    cost = pl.CostEstimate(
        flops=int(80 * N * Ppad),
        transcendentals=int(14 * N * Ppad),
        bytes_accessed=int(in_bytes + 4 * N * CK * 29 * _LANE))

    np_stats, hv_sse, nc_stats = pl.pallas_call(
        _make_fused_kernel(P, R, 2, 5, needs_mask),
        out_shape=out_shape,
        grid_spec=pltpu.PrefetchScalarGridSpec(
            num_scalar_prefetch=0,
            grid=(N, CK, PT),
            in_specs=[cls_spec(2), cls_spec(1), cls_spec(2), cls_spec(2),
                      cls_spec(5), cls_spec(1)],
            out_specs=out_specs,
            scratch_shapes=scratch),
        compiler_params=pltpu.CompilerParams(
            dimension_semantics=("parallel", "parallel", "arbitrary"),
            vmem_limit_bytes=_VMEM_LIMIT),
        cost_estimate=cost,
    )(np_x, np_t, hv_x, hv_t, nc_x, nc_t)

    # Cheap final reductions / ratios in XLA (lane reduce pushed out of kernel)
    np_s = jnp.sum(np_stats, axis=(1, 4))    # (N, 4, 2)
    nc_s = jnp.sum(nc_stats, axis=(1, 4))    # (N, 4, 5)

    def branch_loss(stats, C):
        inter, psum, tsum, ce = (stats[:, 0], stats[:, 1],
                                 stats[:, 2], stats[:, 3])
        ce_loss = jnp.sum(ce) / (N * P)                        # NLL 'mean'
        dice_nc = (2.0 * inter + _SMOOTH) / (psum + tsum + _SMOOTH)
        dice = jnp.sum(1.0 - jnp.mean(dice_nc, axis=0)) / C    # DiceCoeff
        return ce_loss + dice

    loss_np = branch_loss(np_s, 2)
    loss_nc = branch_loss(nc_s, 5)
    # TODO(synk): the PyTorch _HVBranchLoss also computes a gradient-MSE term
    # (Lb via utils.get_gradient_hv) but discards it (loss = La); that dead
    # code is not reproduced here.
    loss_hv = jnp.sum(hv_sse) / (N * 2 * P)
    loss = 2.0 * loss_np + loss_nc + 40.0 * loss_hv
    return loss, loss_np, loss_hv, loss_nc


# --------------------------------------------------------------------------
# Pure-JAX reference (mirrors the PyTorch forward) for the self-test below.
# --------------------------------------------------------------------------
def _hover_loss_ref(np_logits, np_targets, hv_logits, hv_targets,
                    nc_logits, nc_targets):
    def cls_branch(logits, tgt, C):
        logits = logits.astype(jnp.float32)
        logp = jax.nn.log_softmax(logits, axis=1)
        picked = jnp.take_along_axis(logp, tgt[:, None].astype(jnp.int32),
                                     axis=1)
        ce = -jnp.mean(picked)
        probs = jax.nn.softmax(logits, axis=1)
        onehot = jax.nn.one_hot(tgt, C, axis=1, dtype=jnp.float32)
        n = logits.shape[0]
        pf = probs.reshape(n, C, -1)
        tf = onehot.reshape(n, C, -1)
        dice_nc = ((2.0 * jnp.sum(pf * tf, -1) + _SMOOTH)
                   / (jnp.sum(pf, -1) + jnp.sum(tf, -1) + _SMOOTH))
        dice = jnp.sum(1.0 - jnp.mean(dice_nc, axis=0)) / C
        return ce + dice

    loss_np = cls_branch(np_logits, np_targets, 2)
    loss_nc = cls_branch(nc_logits, nc_targets, 5)
    loss_hv = jnp.mean((jnp.tanh(hv_logits.astype(jnp.float32))
                        - hv_targets.astype(jnp.float32)) ** 2)
    loss = 2.0 * loss_np + loss_nc + 40.0 * loss_hv
    return loss, loss_np, loss_hv, loss_nc


if __name__ == "__main__":
    def make_inputs(key, N, H, W):
        k1, k2, k3, k4, k5, k6 = jax.random.split(key, 6)
        np_logits = jax.random.normal(k1, (N, 2, H, W), dtype=jnp.float32)
        np_targets = jax.random.randint(k2, (N, H, W), 0, 2).astype(jnp.int32)
        hv_logits = jax.random.normal(k3, (N, 2, H, W), dtype=jnp.float32)
        hv_targets = jax.random.uniform(k4, (N, 2, H, W), dtype=jnp.float32,
                                        minval=-1.0, maxval=1.0)
        nc_logits = jax.random.normal(k5, (N, 5, H, W), dtype=jnp.float32)
        nc_targets = jax.random.randint(k6, (N, H, W), 0, 5).astype(jnp.int32)
        return (np_logits, np_targets, hv_logits, hv_targets,
                nc_logits, nc_targets)

    key = jax.random.PRNGKey(0)
    k_a, k_b = jax.random.split(key)

    # Small demo shapes (batch=2, 16x16, C = 2/2/5 per HoverLoss asserts).
    args = make_inputs(k_a, 2, 16, 16)
    out = hover_loss(*args)
    jax.block_until_ready(out)
    ref = _hover_loss_ref(*args)
    for o, r in zip(out, ref):
        assert jnp.allclose(o, r, rtol=2e-2, atol=2e-2), (o, r)

    # N=1 with a non-128-multiple pixel count: exercises the masked ragged
    # tiles and the dual-chunk (two-TensorCore) parallel path.
    args2 = make_inputs(k_b, 1, 264, 264)
    out2 = hover_loss(*args2)
    jax.block_until_ready(out2)
    ref2 = _hover_loss_ref(*args2)
    for o, r in zip(out2, ref2):
        assert jnp.allclose(o, r, rtol=2e-2, atol=2e-2), (o, r)

    print("KERNEL_OK")
</pallas_src>

<mosaic_0001>
module attributes {stable_mosaic.version = 11 : i64} {
  func.func @kernel(%arg0: i32, %arg1: i32, %arg2: i32, %arg3: memref<1x2x2x128xf32, #tpu.memory_space<vmem>>, %arg4: memref<1x1x2x128xi32, #tpu.memory_space<vmem>>, %arg5: memref<1x2x2x128xf32, #tpu.memory_space<vmem>>, %arg6: memref<1x2x2x128xf32, #tpu.memory_space<vmem>>, %arg7: memref<1x5x2x128xf32, #tpu.memory_space<vmem>>, %arg8: memref<1x1x2x128xi32, #tpu.memory_space<vmem>>, %arg9: memref<1x1x4x2x128xf32, #tpu.memory_space<vmem>>, %arg10: memref<1x1x1x128xf32, #tpu.memory_space<vmem>>, %arg11: memref<1x1x4x5x128xf32, #tpu.memory_space<vmem>>, %arg12: memref<2x2x128xf32, #tpu.memory_space<vmem>>, %arg13: memref<2x2x128xf32, #tpu.memory_space<vmem>>, %arg14: memref<2x2x128xf32, #tpu.memory_space<vmem>>, %arg15: memref<2x2x128xf32, #tpu.memory_space<vmem>>, %arg16: memref<5x2x128xf32, #tpu.memory_space<vmem>>, %arg17: memref<5x2x128xf32, #tpu.memory_space<vmem>>, %arg18: memref<5x2x128xf32, #tpu.memory_space<vmem>>, %arg19: memref<5x2x128xf32, #tpu.memory_space<vmem>>, %arg20: memref<2x128xf32, #tpu.memory_space<vmem>>) attributes {dimension_semantics = [#tpu.dimension_semantics<parallel>, #tpu.dimension_semantics<parallel>, #tpu.dimension_semantics<arbitrary>], iteration_bounds = array<i64: 2, 1, 1>, scalar_prefetch = 0 : i64, scratch_operands = 9 : i64, tpu.core_type = #tpu.core_type<tc>, window_params = [{transform_indices = @transform_0, window_bounds = array<i64: 1, 2, 2, 128>}, {transform_indices = @transform_1, window_bounds = array<i64: 1, 1, 2, 128>}, {transform_indices = @transform_2, window_bounds = array<i64: 1, 2, 2, 128>}, {transform_indices = @transform_3, window_bounds = array<i64: 1, 2, 2, 128>}, {transform_indices = @transform_4, window_bounds = array<i64: 1, 5, 2, 128>}, {transform_indices = @transform_5, window_bounds = array<i64: 1, 1, 2, 128>}, {transform_indices = @transform_6, window_bounds = array<i64: 1, 1, 4, 2, 128>}, {transform_indices = @transform_7, window_bounds = array<i64: 1, 1, 1, 128>}, {transform_indices = @transform_8, window_bounds = array<i64: 1, 1, 4, 5, 128>}]} {
    %c0_i32 = arith.constant 0 : i32
    %0 = arith.cmpi eq, %arg2, %c0_i32 : i32
    %1 = arith.extui %0 : i1 to i32
    %c0_i32_0 = arith.constant 0 : i32
    %2 = arith.cmpi ne, %1, %c0_i32_0 : i32
    scf.if %2 {
      %cst_90 = arith.constant 0.000000e+00 : f32
      %97 = vector.broadcast %cst_90 : f32 to vector<2x2x128xf32>
      %c0_91 = arith.constant 0 : index
      %c0_92 = arith.constant 0 : index
      %c0_93 = arith.constant 0 : index
      %98 = vector.load %arg12[%c0_91, %c0_92, %c0_93] : memref<2x2x128xf32, #tpu.memory_space<vmem>>, vector<2x2x128xf32>
      tpu.vector_store %arg12[%c0_91, %c0_92, %c0_93], %97 {strides = array<i32>} : memref<2x2x128xf32, #tpu.memory_space<vmem>>, vector<2x2x128xf32>,
      %cst_94 = arith.constant 0.000000e+00 : f32
      %99 = vector.broadcast %cst_94 : f32 to vector<2x2x128xf32>
      %c0_95 = arith.constant 0 : index
      %c0_96 = arith.constant 0 : index
      %c0_97 = arith.constant 0 : index
      %100 = vector.load %arg13[%c0_95, %c0_96, %c0_97] : memref<2x2x128xf32, #tpu.memory_space<vmem>>, vector<2x2x128xf32>
      tpu.vector_store %arg13[%c0_95, %c0_96, %c0_97], %99 {strides = array<i32>} : memref<2x2x128xf32, #tpu.memory_space<vmem>>, vector<2x2x128xf32>,
      %cst_98 = arith.constant 0.000000e+00 : f32
      %101 = vector.broadcast %cst_98 : f32 to vector<2x2x128xf32>
      %c0_99 = arith.constant 0 : index
      %c0_100 = arith.constant 0 : index
      %c0_101 = arith.constant 0 : index
      %102 = vector.load %arg14[%c0_99, %c0_100, %c0_101] : memref<2x2x128xf32, #tpu.memory_space<vmem>>, vector<2x2x128xf32>
      tpu.vector_store %arg14[%c0_99, %c0_100, %c0_101], %101 {strides = array<i32>} : memref<2x2x128xf32, #tpu.memory_space<vmem>>, vector<2x2x128xf32>,
      %cst_102 = arith.constant 0.000000e+00 : f32
      %103 = vector.broadcast %cst_102 : f32 to vector<2x2x128xf32>
      %c0_103 = arith.constant 0 : index
      %c0_104 = arith.constant 0 : index
      %c0_105 = arith.constant 0 : index
      %104 = vector.load %arg15[%c0_103, %c0_104, %c0_105] : memref<2x2x128xf32, #tpu.memory_space<vmem>>, vector<2x2x128xf32>
      tpu.vector_store %arg15[%c0_103, %c0_104, %c0_105], %103 {strides = array<i32>} : memref<2x2x128xf32, #tpu.memory_space<vmem>>, vector<2x2x128xf32>,
      %cst_106 = arith.constant 0.000000e+00 : f32
      %105 = vector.broadcast %cst_106 : f32 to vector<5x2x128xf32>
      %c0_107 = arith.constant 0 : index
      %c0_108 = arith.constant 0 : index
      %c0_109 = arith.constant 0 : index
      %106 = vector.load %arg16[%c0_107, %c0_108, %c0_109] : memref<5x2x128xf32, #tpu.memory_space<vmem>>, vector<5x2x128xf32>
      tpu.vector_store %arg16[%c0_107, %c0_108, %c0_109], %105 {strides = array<i32>} : memref<5x2x128xf32, #tpu.memory_space<vmem>>, vector<5x2x128xf32>,
      %cst_110 = arith.constant 0.000000e+00 : f32
      %107 = vector.broadcast %cst_110 : f32 to vector<5x2x128xf32>
      %c0_111 = arith.constant 0 : index
      %c0_112 = arith.constant 0 : index
      %c0_113 = arith.constant 0 : index
      %108 = vector.load %arg17[%c0_111, %c0_112, %c0_113] : memref<5x2x128xf32, #tpu.memory_space<vmem>>, vector<5x2x128xf32>
      tpu.vector_store %arg17[%c0_111, %c0_112, %c0_113], %107 {strides = array<i32>} : memref<5x2x128xf32, #tpu.memory_space<vmem>>, vector<5x2x128xf32>,
      %cst_114 = arith.constant 0.000000e+00 : f32
      %109 = vector.broadcast %cst_114 : f32 to vector<5x2x128xf32>
      %c0_115 = arith.constant 0 : index
      %c0_116 = arith.constant 0 : index
      %c0_117 = arith.constant 0 : index
      %110 = vector.load %arg18[%c0_115, %c0_116, %c0_117] : memref<5x2x128xf32, #tpu.memory_space<vmem>>, vector<5x2x128xf32>
      tpu.vector_store %arg18[%c0_115, %c0_116, %c0_117], %109 {strides = array<i32>} : memref<5x2x128xf32, #tpu.memory_space<vmem>>, vector<5x2x128xf32>,
      %cst_118 = arith.constant 0.000000e+00 : f32
      %111 = vector.broadcast %cst_118 : f32 to vector<5x2x128xf32>
      %c0_119 = arith.constant 0 : index
      %c0_120 = arith.constant 0 : index
      %c0_121 = arith.constant 0 : index
      %112 = vector.load %arg19[%c0_119, %c0_120, %c0_121] : memref<5x2x128xf32, #tpu.memory_space<vmem>>, vector<5x2x128xf32>
      tpu.vector_store %arg19[%c0_119, %c0_120, %c0_121], %111 {strides = array<i32>} : memref<5x2x128xf32, #tpu.memory_space<vmem>>, vector<5x2x128xf32>,
      %cst_122 = arith.constant 0.000000e+00 : f32
      %113 = vector.broadcast %cst_122 : f32 to vector<2x128xf32>
      %c0_123 = arith.constant 0 : index
      %c0_124 = arith.constant 0 : index
      %114 = vector.load %arg20[%c0_123, %c0_124] : memref<2x128xf32, #tpu.memory_space<vmem>>, vector<2x128xf32>
      tpu.vector_store %arg20[%c0_123, %c0_124], %113 {strides = array<i32>} : memref<2x128xf32, #tpu.memory_space<vmem>>, vector<2x128xf32>,
    } else {
    }
    %c0 = arith.constant 0 : index
    %c0_1 = arith.constant 0 : index
    %c0_2 = arith.constant 0 : index
    %c0_3 = arith.constant 0 : index
    %3 = vector.load %arg3[%c0, %c0_1, %c0_2, %c0_3] : memref<1x2x2x128xf32, #tpu.memory_space<vmem>>, vector<1x2x2x128xf32>
    %4 = vector.shape_cast %3 : vector<1x2x2x128xf32> to vector<2x2x128xf32>
    %c0_4 = arith.constant 0 : index
    %c0_5 = arith.constant 0 : index
    %c0_6 = arith.constant 0 : index
    %c0_7 = arith.constant 0 : index
    %5 = vector.load %arg4[%c0_4, %c0_5, %c0_6, %c0_7] : memref<1x1x2x128xi32, #tpu.memory_space<vmem>>, vector<1x1x2x128xi32>
    %6 = vector.shape_cast %5 : vector<1x1x2x128xi32> to vector<2x128xi32>
    %cst = arith.constant dense<0xFF800000> : vector<2x128xf32>
    %7 = vector.multi_reduction <maximumf>, %4, %cst [0] : vector<2x2x128xf32> to vector<2x128xf32>
    %8 = vector.shape_cast %7 : vector<2x128xf32> to vector<1x2x128xf32>
    %9 = vector.broadcast %8 : vector<1x2x128xf32> to vector<2x2x128xf32>
    %10 = arith.subf %4, %9 : vector<2x2x128xf32>
    %11 = math.exp %10 : vector<2x2x128xf32>
    %cst_8 = arith.constant dense<0.000000e+00> : vector<2x128xf32>
    %12 = vector.multi_reduction <add>, %11, %cst_8 [0] : vector<2x2x128xf32> to vector<2x128xf32>
    %13 = vector.shape_cast %12 : vector<2x128xf32> to vector<1x2x128xf32>
    %14 = tpu.reciprocal %13 {approx = true} : vector<1x2x128xf32> -> vector<1x2x128xf32>
    %15 = vector.broadcast %14 : vector<1x2x128xf32> to vector<2x2x128xf32>
    %16 = arith.mulf %11, %15 : vector<2x2x128xf32>
    %17 = math.log %13 : vector<1x2x128xf32>
    %18 = vector.broadcast %17 : vector<1x2x128xf32> to vector<2x2x128xf32>
    %19 = arith.subf %18, %10 : vector<2x2x128xf32>
    %20 = tpu.iota {dimensions = array<i32: 0>} : vector<2x2x128xi32>
    %21 = vector.shape_cast %6 : vector<2x128xi32> to vector<1x2x128xi32>
    %22 = vector.broadcast %21 : vector<1x2x128xi32> to vector<2x2x128xi32>
    %23 = arith.cmpi eq, %20, %22 : vector<2x2x128xi32>
    %c0_9 = arith.constant 0 : index
    %c0_10 = arith.constant 0 : index
    %c0_11 = arith.constant 0 : index
    %24 = vector.load %arg13[%c0_9, %c0_10, %c0_11] : memref<2x2x128xf32, #tpu.memory_space<vmem>>, vector<2x2x128xf32>
    %25 = arith.addf %24, %16 : vector<2x2x128xf32>
    %c0_12 = arith.constant 0 : index
    %c0_13 = arith.constant 0 : index
    %c0_14 = arith.constant 0 : index
    %26 = vector.load %arg13[%c0_12, %c0_13, %c0_14] : memref<2x2x128xf32, #tpu.memory_space<vmem>>, vector<2x2x128xf32>
    tpu.vector_store %arg13[%c0_12, %c0_13, %c0_14], %25 {strides = array<i32>} : memref<2x2x128xf32, #tpu.memory_space<vmem>>, vector<2x2x128xf32>,
    %c0_15 = arith.constant 0 : index
    %c0_16 = arith.constant 0 : index
    %c0_17 = arith.constant 0 : index
    %27 = vector.load %arg12[%c0_15, %c0_16, %c0_17] : memref<2x2x128xf32, #tpu.memory_space<vmem>>, vector<2x2x128xf32>
    %cst_18 = arith.constant 0.000000e+00 : f32
    %28 = vector.broadcast %cst_18 : f32 to vector<2x2x128xf32>
    %29 = arith.select %23, %16, %28 : vector<2x2x128xi1>, vector<2x2x128xf32>
    %30 = arith.addf %27, %29 : vector<2x2x128xf32>
    %c0_19 = arith.constant 0 : index
    %c0_20 = arith.constant 0 : index
    %c0_21 = arith.constant 0 : index
    %31 = vector.load %arg12[%c0_19, %c0_20, %c0_21] : memref<2x2x128xf32, #tpu.memory_space<vmem>>, vector<2x2x128xf32>
    tpu.vector_store %arg12[%c0_19, %c0_20, %c0_21], %30 {strides = array<i32>} : memref<2x2x128xf32, #tpu.memory_space<vmem>>, vector<2x2x128xf32>,
    %c0_22 = arith.constant 0 : index
    %c0_23 = arith.constant 0 : index
    %c0_24 = arith.constant 0 : index
    %32 = vector.load %arg14[%c0_22, %c0_23, %c0_24] : memref<2x2x128xf32, #tpu.memory_space<vmem>>, vector<2x2x128xf32>
    %cst_25 = arith.constant 1.000000e+00 : f32
    %cst_26 = arith.constant 0.000000e+00 : f32
    %33 = vector.broadcast %cst_25 : f32 to vector<2x2x128xf32>
    %34 = vector.broadcast %cst_26 : f32 to vector<2x2x128xf32>
    %35 = arith.select %23, %33, %34 : vector<2x2x128xi1>, vector<2x2x128xf32>
    %36 = arith.addf %32, %35 : vector<2x2x128xf32>
    %c0_27 = arith.constant 0 : index
    %c0_28 = arith.constant 0 : index
    %c0_29 = arith.constant 0 : index
    %37 = vector.load %arg14[%c0_27, %c0_28, %c0_29] : memref<2x2x128xf32, #tpu.memory_space<vmem>>, vector<2x2x128xf32>
    tpu.vector_store %arg14[%c0_27, %c0_28, %c0_29], %36 {strides = array<i32>} : memref<2x2x128xf32, #tpu.memory_space<vmem>>, vector<2x2x128xf32>,
    %c0_30 = arith.constant 0 : index
    %c0_31 = arith.constant 0 : index
    %c0_32 = arith.constant 0 : index
    %38 = vector.load %arg15[%c0_30, %c0_31, %c0_32] : memref<2x2x128xf32, #tpu.memory_space<vmem>>, vector<2x2x128xf32>
    %cst_33 = arith.constant 0.000000e+00 : f32
    %39 = vector.broadcast %cst_33 : f32 to vector<2x2x128xf32>
    %40 = arith.select %23, %19, %39 : vector<2x2x128xi1>, vector<2x2x128xf32>
    %41 = arith.addf %38, %40 : vector<2x2x128xf32>
    %c0_34 = arith.constant 0 : index
    %c0_35 = arith.constant 0 : index
    %c0_36 = arith.constant 0 : index
    %42 = vector.load %arg15[%c0_34, %c0_35, %c0_36] : memref<2x2x128xf32, #tpu.memory_space<vmem>>, vector<2x2x128xf32>
    tpu.vector_store %arg15[%c0_34, %c0_35, %c0_36], %41 {strides = array<i32>} : memref<2x2x128xf32, #tpu.memory_space<vmem>>, vector<2x2x128xf32>,
    %c0_37 = arith.constant 0 : index
    %c0_38 = arith.constant 0 : index
    %c0_39 = arith.constant 0 : index
    %c0_40 = arith.constant 0 : index
    %43 = vector.load %arg7[%c0_37, %c0_38, %c0_39, %c0_40] : memref<1x5x2x128xf32, #tpu.memory_space<vmem>>, vector<1x5x2x128xf32>
    %44 = vector.shape_cast %43 : vector<1x5x2x128xf32> to vector<5x2x128xf32>
    %c0_41 = arith.constant 0 : index
    %c0_42 = arith.constant 0 : index
    %c0_43 = arith.constant 0 : index
    %c0_44 = arith.constant 0 : index
    %45 = vector.load %arg8[%c0_41, %c0_42, %c0_43, %c0_44] : memref<1x1x2x128xi32, #tpu.memory_space<vmem>>, vector<1x1x2x128xi32>
    %46 = vector.shape_cast %45 : vector<1x1x2x128xi32> to vector<2x128xi32>
    %cst_45 = arith.constant dense<0xFF800000> : vector<2x128xf32>
    %47 = vector.multi_reduction <maximumf>, %44, %cst_45 [0] : vector<5x2x128xf32> to vector<2x128xf32>
    %48 = vector.shape_cast %47 : vector<2x128xf32> to vector<1x2x128xf32>
    %49 = vector.broadcast %48 : vector<1x2x128xf32> to vector<5x2x128xf32>
    %50 = arith.subf %44, %49 : vector<5x2x128xf32>
    %51 = math.exp %50 : vector<5x2x128xf32>
    %cst_46 = arith.constant dense<0.000000e+00> : vector<2x128xf32>
    %52 = vector.multi_reduction <add>, %51, %cst_46 [0] : vector<5x2x128xf32> to vector<2x128xf32>
    %53 = vector.shape_cast %52 : vector<2x128xf32> to vector<1x2x128xf32>
    %54 = tpu.reciprocal %53 {approx = true} : vector<1x2x128xf32> -> vector<1x2x128xf32>
    %55 = vector.broadcast %54 : vector<1x2x128xf32> to vector<5x2x128xf32>
    %56 = arith.mulf %51, %55 : vector<5x2x128xf32>
    %57 = math.log %53 : vector<1x2x128xf32>
    %58 = vector.broadcast %57 : vector<1x2x128xf32> to vector<5x2x128xf32>
    %59 = arith.subf %58, %50 : vector<5x2x128xf32>
    %60 = tpu.iota {dimensions = array<i32: 0>} : vector<5x2x128xi32>
    %61 = vector.shape_cast %46 : vector<2x128xi32> to vector<1x2x128xi32>
    %62 = vector.broadcast %61 : vector<1x2x128xi32> to vector<5x2x128xi32>
    %63 = arith.cmpi eq, %60, %62 : vector<5x2x128xi32>
    %c0_47 = arith.constant 0 : index
    %c0_48 = arith.constant 0 : index
    %c0_49 = arith.constant 0 : index
    %64 = vector.load %arg17[%c0_47, %c0_48, %c0_49] : memref<5x2x128xf32, #tpu.memory_space<vmem>>, vector<5x2x128xf32>
    %65 = arith.addf %64, %56 : vector<5x2x128xf32>
    %c0_50 = arith.constant 0 : index
    %c0_51 = arith.constant 0 : index
    %c0_52 = arith.constant 0 : index
    %66 = vector.load %arg17[%c0_50, %c0_51, %c0_52] : memref<5x2x128xf32, #tpu.memory_space<vmem>>, vector<5x2x128xf32>
    tpu.vector_store %arg17[%c0_50, %c0_51, %c0_52], %65 {strides = array<i32>} : memref<5x2x128xf32, #tpu.memory_space<vmem>>, vector<5x2x128xf32>,
    %c0_53 = arith.constant 0 : index
    %c0_54 = arith.constant 0 : index
    %c0_55 = arith.constant 0 : index
    %67 = vector.load %arg16[%c0_53, %c0_54, %c0_55] : memref<5x2x128xf32, #tpu.memory_space<vmem>>, vector<5x2x128xf32>
    %cst_56 = arith.constant 0.000000e+00 : f32
    %68 = vector.broadcast %cst_56 : f32 to vector<5x2x128xf32>
    %69 = arith.select %63, %56, %68 : vector<5x2x128xi1>, vector<5x2x128xf32>
    %70 = arith.addf %67, %69 : vector<5x2x128xf32>
    %c0_57 = arith.constant 0 : index
    %c0_58 = arith.constant 0 : index
    %c0_59 = arith.constant 0 : index
    %71 = vector.load %arg16[%c0_57, %c0_58, %c0_59] : memref<5x2x128xf32, #tpu.memory_space<vmem>>, vector<5x2x128xf32>
    tpu.vector_store %arg16[%c0_57, %c0_58, %c0_59], %70 {strides = array<i32>} : memref<5x2x128xf32, #tpu.memory_space<vmem>>, vector<5x2x128xf32>,
    %c0_60 = arith.constant 0 : index
    %c0_61 = arith.constant 0 : index
    %c0_62 = arith.constant 0 : index
    %72 = vector.load %arg18[%c0_60, %c0_61, %c0_62] : memref<5x2x128xf32, #tpu.memory_space<vmem>>, vector<5x2x128xf32>
    %cst_63 = arith.constant 1.000000e+00 : f32
    %cst_64 = arith.constant 0.000000e+00 : f32
    %73 = vector.broadcast %cst_63 : f32 to vector<5x2x128xf32>
    %74 = vector.broadcast %cst_64 : f32 to vector<5x2x128xf32>
    %75 = arith.select %63, %73, %74 : vector<5x2x128xi1>, vector<5x2x128xf32>
    %76 = arith.addf %72, %75 : vector<5x2x128xf32>
    %c0_65 = arith.constant 0 : index
    %c0_66 = arith.constant 0 : index
    %c0_67 = arith.constant 0 : index
    %77 = vector.load %arg18[%c0_65, %c0_66, %c0_67] : memref<5x2x128xf32, #tpu.memory_space<vmem>>, vector<5x2x128xf32>
    tpu.vector_store %arg18[%c0_65, %c0_66, %c0_67], %76 {strides = array<i32>} : memref<5x2x128xf32, #tpu.memory_space<vmem>>, vector<5x2x128xf32>,
    %c0_68 = arith.constant 0 : index
    %c0_69 = arith.constant 0 : index
    %c0_70 = arith.constant 0 : index
    %78 = vector.load %arg19[%c0_68, %c0_69, %c0_70] : memref<5x2x128xf32, #tpu.memory_space<vmem>>, vector<5x2x128xf32>
    %cst_71 = arith.constant 0.000000e+00 : f32
    %79 = vector.broadcast %cst_71 : f32 to vector<5x2x128xf32>
    %80 = arith.select %63, %59, %79 : vector<5x2x128xi1>, vector<5x2x128xf32>
    %81 = arith.addf %78, %80 : vector<5x2x128xf32>
    %c0_72 = arith.constant 0 : index
    %c0_73 = arith.constant 0 : index
    %c0_74 = arith.constant 0 : index
    %82 = vector.load %arg19[%c0_72, %c0_73, %c0_74] : memref<5x2x128xf32, #tpu.memory_space<vmem>>, vector<5x2x128xf32>
    tpu.vector_store %arg19[%c0_72, %c0_73, %c0_74], %81 {strides = array<i32>} : memref<5x2x128xf32, #tpu.memory_space<vmem>>, vector<5x2x128xf32>,
    %c0_75 = arith.constant 0 : index
    %c0_76 = arith.constant 0 : index
    %c0_77 = arith.constant 0 : index
    %c0_78 = arith.constant 0 : index
    %83 = vector.load %arg5[%c0_75, %c0_76, %c0_77, %c0_78] : memref<1x2x2x128xf32, #tpu.memory_space<vmem>>, vector<1x2x2x128xf32>
    %84 = vector.shape_cast %83 : vector<1x2x2x128xf32> to vector<2x2x128xf32>
    %85 = math.tanh %84 : vector<2x2x128xf32>
    %c0_79 = arith.constant 0 : index
    %c0_80 = arith.constant 0 : index
    %c0_81 = arith.constant 0 : index
    %c0_82 = arith.constant 0 : index
    %86 = vector.load %arg6[%c0_79, %c0_80, %c0_81, %c0_82] : memref<1x2x2x128xf32, #tpu.memory_space<vmem>>, vector<1x2x2x128xf32>
    %87 = vector.shape_cast %86 : vector<1x2x2x128xf32> to vector<2x2x128xf32>
    %88 = arith.subf %85, %87 : vector<2x2x128xf32>
    %89 = arith.mulf %88, %88 : vector<2x2x128xf32>
    %c0_83 = arith.constant 0 : index
    %c0_84 = arith.constant 0 : index
    %90 = vector.load %arg20[%c0_83, %c0_84] : memref<2x128xf32, #tpu.memory_space<vmem>>, vector<2x128xf32>
    %cst_85 = arith.constant dense<0.000000e+00> : vector<2x128xf32>
    %91 = vector.multi_reduction <add>, %89, %cst_85 [0] : vector<2x2x128xf32> to vector<2x128xf32>
    %92 = arith.addf %90, %91 : vector<2x128xf32>
    %c0_86 = arith.constant 0 : index
    %c0_87 = arith.constant 0 : index
    %93 = vector.load %arg20[%c0_86, %c0_87] : memref<2x128xf32, #tpu.memory_space<vmem>>, vector<2x128xf32>
    tpu.vector_store %arg20[%c0_86, %c0_87], %92 {strides = array<i32>} : memref<2x128xf32, #tpu.memory_space<vmem>>, vector<2x128xf32>,
    %c0_i32_88 = arith.constant 0 : i32
    %94 = arith.cmpi eq, %arg2, %c0_i32_88 : i32
    %95 = arith.extui %94 : i1 to i32
    %c0_i32_89 = arith.constant 0 : i32
    %96 = arith.cmpi ne, %95, %c0_i32_89 : i32
    scf.if %96 {
      %c0_90 = arith.constant 0 : index
      %c0_91 = arith.constant 0 : index
      %c0_92 = arith.constant 0 : index
      %97 = vector.load %arg12[%c0_90, %c0_91, %c0_92] : memref<2x2x128xf32, #tpu.memory_space<vmem>>, vector<2x2x128xf32>
      %cst_93 = arith.constant dense<0.000000e+00> : vector<2x128xf32>
      %98 = vector.multi_reduction <add>, %97, %cst_93 [1] : vector<2x2x128xf32> to vector<2x128xf32>
      %c0_94 = arith.constant 0 : index
      %c0_95 = arith.constant 0 : index
      %c0_96 = arith.constant 0 : index
      %c0_97 = arith.constant 0 : index
      %c0_98 = arith.constant 0 : index
      %99 = vector.load %arg9[%c0_94, %c0_95, %c0_96, %c0_97, %c0_98] : memref<1x1x4x2x128xf32, #tpu.memory_space<vmem>>, vector<1x1x1x2x128xf32>
      %100 = vector.shape_cast %99 : vector<1x1x1x2x128xf32> to vector<2x128xf32>
      %101 = vector.shape_cast %98 : vector<2x128xf32> to vector<1x1x1x2x128xf32>
      tpu.vector_store %arg9[%c0_94, %c0_95, %c0_96, %c0_97, %c0_98], %101 {strides = array<i32>} : memref<1x1x4x2x128xf32, #tpu.memory_space<vmem>>, vector<1x1x1x2x128xf32>,
      %c0_99 = arith.constant 0 : index
      %c0_100 = arith.constant 0 : index
      %c0_101 = arith.constant 0 : index
      %102 = vector.load %arg13[%c0_99, %c0_100, %c0_101] : memref<2x2x128xf32, #tpu.memory_space<vmem>>, vector<2x2x128xf32>
      %cst_102 = arith.constant dense<0.000000e+00> : vector<2x128xf32>
      %103 = vector.multi_reduction <add>, %102, %cst_102 [1] : vector<2x2x128xf32> to vector<2x128xf32>
      %c0_103 = arith.constant 0 : index
      %c0_104 = arith.constant 0 : index
      %c1 = arith.constant 1 : index
      %c0_105 = arith.constant 0 : index
      %c0_106 = arith.constant 0 : index
      %104 = vector.load %arg9[%c0_103, %c0_104, %c1, %c0_105, %c0_106] : memref<1x1x4x2x128xf32, #tpu.memory_space<vmem>>, vector<1x1x1x2x128xf32>
      %105 = vector.shape_cast %104 : vector<1x1x1x2x128xf32> to vector<2x128xf32>
      %106 = vector.shape_cast %103 : vector<2x128xf32> to vector<1x1x1x2x128xf32>
      tpu.vector_store %arg9[%c0_103, %c0_104, %c1, %c0_105, %c0_106], %106 {strides = array<i32>} : memref<1x1x4x2x128xf32, #tpu.memory_space<vmem>>, vector<1x1x1x2x128xf32>,
      %c0_107 = arith.constant 0 : index
      %c0_108 = arith.constant 0 : index
      %c0_109 = arith.constant 0 : index
      %107 = vector.load %arg14[%c0_107, %c0_108, %c0_109] : memref<2x2x128xf32, #tpu.memory_space<vmem>>, vector<2x2x128xf32>
      %cst_110 = arith.constant dense<0.000000e+00> : vector<2x128xf32>
      %108 = vector.multi_reduction <add>, %107, %cst_110 [1] : vector<2x2x128xf32> to vector<2x128xf32>
      %c0_111 = arith.constant 0 : index
      %c0_112 = arith.constant 0 : index
      %c2 = arith.constant 2 : index
      %c0_113 = arith.constant 0 : index
      %c0_114 = arith.constant 0 : index
      %109 = vector.load %arg9[%c0_111, %c0_112, %c2, %c0_113, %c0_114] : memref<1x1x4x2x128xf32, #tpu.memory_space<vmem>>, vector<1x1x1x2x128xf32>
      %110 = vector.shape_cast %109 : vector<1x1x1x2x128xf32> to vector<2x128xf32>
      %111 = vector.shape_cast %108 : vector<2x128xf32> to vector<1x1x1x2x128xf32>
      tpu.vector_store %arg9[%c0_111, %c0_112, %c2, %c0_113, %c0_114], %111 {strides = array<i32>} : memref<1x1x4x2x128xf32, #tpu.memory_space<vmem>>, vector<1x1x1x2x128xf32>,
      %c0_115 = arith.constant 0 : index
      %c0_116 = arith.constant 0 : index
      %c0_117 = arith.constant 0 : index
      %112 = vector.load %arg15[%c0_115, %c0_116, %c0_117] : memref<2x2x128xf32, #tpu.memory_space<vmem>>, vector<2x2x128xf32>
      %cst_118 = arith.constant dense<0.000000e+00> : vector<2x128xf32>
      %113 = vector.multi_reduction <add>, %112, %cst_118 [1] : vector<2x2x128xf32> to vector<2x128xf32>
      %c0_119 = arith.constant 0 : index
      %c0_120 = arith.constant 0 : index
      %c3 = arith.constant 3 : index
      %c0_121 = arith.constant 0 : index
      %c0_122 = arith.constant 0 : index
      %114 = vector.load %arg9[%c0_119, %c0_120, %c3, %c0_121, %c0_122] : memref<1x1x4x2x128xf32, #tpu.memory_space<vmem>>, vector<1x1x1x2x128xf32>
      %115 = vector.shape_cast %114 : vector<1x1x1x2x128xf32> to vector<2x128xf32>
      %116 = vector.shape_cast %113 : vector<2x128xf32> to vector<1x1x1x2x128xf32>
      tpu.vector_store %arg9[%c0_119, %c0_120, %c3, %c0_121, %c0_122], %116 {strides = array<i32>} : memref<1x1x4x2x128xf32, #tpu.memory_space<vmem>>, vector<1x1x1x2x128xf32>,
      %c0_123 = arith.constant 0 : index
      %c0_124 = arith.constant 0 : index
      %c0_125 = arith.constant 0 : index
      %117 = vector.load %arg16[%c0_123, %c0_124, %c0_125] : memref<5x2x128xf32, #tpu.memory_space<vmem>>, vector<5x2x128xf32>
      %cst_126 = arith.constant dense<0.000000e+00> : vector<5x128xf32>
      %118 = vector.multi_reduction <add>, %117, %cst_126 [1] : vector<5x2x128xf32> to vector<5x128xf32>
      %c0_127 = arith.constant 0 : index
      %c0_128 = arith.constant 0 : index
      %c0_129 = arith.constant 0 : index
      %c0_130 = arith.constant 0 : index
      %c0_131 = arith.constant 0 : index
      %119 = vector.load %arg11[%c0_127, %c0_128, %c0_129, %c0_130, %c0_131] : memref<1x1x4x5x128xf32, #tpu.memory_space<vmem>>, vector<1x1x1x5x128xf32>
      %120 = vector.shape_cast %119 : vector<1x1x1x5x128xf32> to vector<5x128xf32>
      %121 = vector.shape_cast %118 : vector<5x128xf32> to vector<1x1x1x5x128xf32>
      tpu.vector_store %arg11[%c0_127, %c0_128, %c0_129, %c0_130, %c0_131], %121 {strides = array<i32>} : memref<1x1x4x5x128xf32, #tpu.memory_space<vmem>>, vector<1x1x1x5x128xf32>,
      %c0_132 = arith.constant 0 : index
      %c0_133 = arith.constant 0 : index
      %c0_134 = arith.constant 0 : index
      %122 = vector.load %arg17[%c0_132, %c0_133, %c0_134] : memref<5x2x128xf32, #tpu.memory_space<vmem>>, vector<5x2x128xf32>
      %cst_135 = arith.constant dense<0.000000e+00> : vector<5x128xf32>
      %123 = vector.multi_reduction <add>, %122, %cst_135 [1] : vector<5x2x128xf32> to vector<5x128xf32>
      %c0_136 = arith.constant 0 : index
      %c0_137 = arith.constant 0 : index
      %c1_138 = arith.constant 1 : index
      %c0_139 = arith.constant 0 : index
      %c0_140 = arith.constant 0 : index
      %124 = vector.load %arg11[%c0_136, %c0_137, %c1_138, %c0_139, %c0_140] : memref<1x1x4x5x128xf32, #tpu.memory_space<vmem>>, vector<1x1x1x5x128xf32>
      %125 = vector.shape_cast %124 : vector<1x1x1x5x128xf32> to vector<5x128xf32>
      %126 = vector.shape_cast %123 : vector<5x128xf32> to vector<1x1x1x5x128xf32>
      tpu.vector_store %arg11[%c0_136, %c0_137, %c1_138, %c0_139, %c0_140], %126 {strides = array<i32>} : memref<1x1x4x5x128xf32, #tpu.memory_space<vmem>>, vector<1x1x1x5x128xf32>,
      %c0_141 = arith.constant 0 : index
      %c0_142 = arith.constant 0 : index
      %c0_143 = arith.constant 0 : index
      %127 = vector.load %arg18[%c0_141, %c0_142, %c0_143] : memref<5x2x128xf32, #tpu.memory_space<vmem>>, vector<5x2x128xf32>
      %cst_144 = arith.constant dense<0.000000e+00> : vector<5x128xf32>
      %128 = vector.multi_reduction <add>, %127, %cst_144 [1] : vector<5x2x128xf32> to vector<5x128xf32>
      %c0_145 = arith.constant 0 : index
      %c0_146 = arith.constant 0 : index
      %c2_147 = arith.constant 2 : index
      %c0_148 = arith.constant 0 : index
      %c0_149 = arith.constant 0 : index
      %129 = vector.load %arg11[%c0_145, %c0_146, %c2_147, %c0_148, %c0_149] : memref<1x1x4x5x128xf32, #tpu.memory_space<vmem>>, vector<1x1x1x5x128xf32>
      %130 = vector.shape_cast %129 : vector<1x1x1x5x128xf32> to vector<5x128xf32>
      %131 = vector.shape_cast %128 : vector<5x128xf32> to vector<1x1x1x5x128xf32>
      tpu.vector_store %arg11[%c0_145, %c0_146, %c2_147, %c0_148, %c0_149], %131 {strides = array<i32>} : memref<1x1x4x5x128xf32, #tpu.memory_space<vmem>>, vector<1x1x1x5x128xf32>,
      %c0_150 = arith.constant 0 : index
      %c0_151 = arith.constant 0 : index
      %c0_152 = arith.constant 0 : index
      %132 = vector.load %arg19[%c0_150, %c0_151, %c0_152] : memref<5x2x128xf32, #tpu.memory_space<vmem>>, vector<5x2x128xf32>
      %cst_153 = arith.constant dense<0.000000e+00> : vector<5x128xf32>
      %133 = vector.multi_reduction <add>, %132, %cst_153 [1] : vector<5x2x128xf32> to vector<5x128xf32>
      %c0_154 = arith.constant 0 : index
      %c0_155 = arith.constant 0 : index
      %c3_156 = arith.constant 3 : index
      %c0_157 = arith.constant 0 : index
      %c0_158 = arith.constant 0 : index
      %134 = vector.load %arg11[%c0_154, %c0_155, %c3_156, %c0_157, %c0_158] : memref<1x1x4x5x128xf32, #tpu.memory_space<vmem>>, vector<1x1x1x5x128xf32>
      %135 = vector.shape_cast %134 : vector<1x1x1x5x128xf32> to vector<5x128xf32>
      %136 = vector.shape_cast %133 : vector<5x128xf32> to vector<1x1x1x5x128xf32>
      tpu.vector_store %arg11[%c0_154, %c0_155, %c3_156, %c0_157, %c0_158], %136 {strides = array<i32>} : memref<1x1x4x5x128xf32, #tpu.memory_space<vmem>>, vector<1x1x1x5x128xf32>,
      %c0_159 = arith.constant 0 : index
      %c0_160 = arith.constant 0 : index
      %137 = vector.load %arg20[%c0_159, %c0_160] : memref<2x128xf32, #tpu.memory_space<vmem>>, vector<2x128xf32>
      %cst_161 = arith.constant dense<0.000000e+00> : vector<128xf32>
      %138 = vector.multi_reduction <add>, %137, %cst_161 [0] : vector<2x128xf32> to vector<128xf32>
      %139 = vector.shape_cast %138 : vector<128xf32> to vector<1x128xf32>
      %c0_162 = arith.constant 0 : index
      %c0_163 = arith.constant 0 : index
      %c0_164 = arith.constant 0 : index
      %c0_165 = arith.constant 0 : index
      %140 = vector.load %arg10[%c0_162, %c0_163, %c0_164, %c0_165] : memref<1x1x1x128xf32, #tpu.memory_space<vmem>>, vector<1x1x1x128xf32>
      %141 = vector.shape_cast %140 : vector<1x1x1x128xf32> to vector<1x128xf32>
      %142 = vector.shape_cast %139 : vector<1x128xf32> to vector<1x1x1x128xf32>
      tpu.vector_store %arg10[%c0_162, %c0_163, %c0_164, %c0_165], %142 {strides = array<i32>} : memref<1x1x1x128xf32, #tpu.memory_space<vmem>>, vector<1x1x1x128xf32>,
    } else {
    }
    return
  }
  func.func @transform_0(%arg0: i32, %arg1: i32, %arg2: i32) -> (i32, i32, i32, i32) {
    %c1_i32 = arith.constant 1 : i32
    %0 = arith.muli %arg1, %c1_i32 : i32
    %1 = arith.addi %0, %arg2 : i32
    %c0_i32 = arith.constant 0 : i32
    %2 = arith.minsi %1, %c0_i32 : i32
    %c0_i32_0 = arith.constant 0 : i32
    %c0_i32_1 = arith.constant 0 : i32
    %c0_i32_2 = arith.constant 0 : i32
    return %arg0, %c0_i32_0, %2, %c0_i32_1 : i32, i32, i32, i32
  }
  func.func @transform_1(%arg0: i32, %arg1: i32, %arg2: i32) -> (i32, i32, i32, i32) {
    %c1_i32 = arith.constant 1 : i32
    %0 = arith.muli %arg1, %c1_i32 : i32
    %1 = arith.addi %0, %arg2 : i32
    %c0_i32 = arith.constant 0 : i32
    %2 = arith.minsi %1, %c0_i32 : i32
    %c0_i32_0 = arith.constant 0 : i32
    %c0_i32_1 = arith.constant 0 : i32
    %c0_i32_2 = arith.constant 0 : i32
    return %arg0, %c0_i32_0, %2, %c0_i32_1 : i32, i32, i32, i32
  }
  func.func @transform_2(%arg0: i32, %arg1: i32, %arg2: i32) -> (i32, i32, i32, i32) {
    %c1_i32 = arith.constant 1 : i32
    %0 = arith.muli %arg1, %c1_i32 : i32
    %1 = arith.addi %0, %arg2 : i32
    %c0_i32 = arith.constant 0 : i32
    %2 = arith.minsi %1, %c0_i32 : i32
    %c0_i32_0 = arith.constant 0 : i32
    %c0_i32_1 = arith.constant 0 : i32
    %c0_i32_2 = arith.constant 0 : i32
    return %arg0, %c0_i32_0, %2, %c0_i32_1 : i32, i32, i32, i32
  }
  func.func @transform_3(%arg0: i32, %arg1: i32, %arg2: i32) -> (i32, i32, i32, i32) {
    %c1_i32 = arith.constant 1 : i32
    %0 = arith.muli %arg1, %c1_i32 : i32
    %1 = arith.addi %0, %arg2 : i32
    %c0_i32 = arith.constant 0 : i32
    %2 = arith.minsi %1, %c0_i32 : i32
    %c0_i32_0 = arith.constant 0 : i32
    %c0_i32_1 = arith.constant 0 : i32
    %c0_i32_2 = arith.constant 0 : i32
    return %arg0, %c0_i32_0, %2, %c0_i32_1 : i32, i32, i32, i32
  }
  func.func @transform_4(%arg0: i32, %arg1: i32, %arg2: i32) -> (i32, i32, i32, i32) {
    %c1_i32 = arith.constant 1 : i32
    %0 = arith.muli %arg1, %c1_i32 : i32
    %1 = arith.addi %0, %arg2 : i32
    %c0_i32 = arith.constant 0 : i32
    %2 = arith.minsi %1, %c0_i32 : i32
    %c0_i32_0 = arith.constant 0 : i32
    %c0_i32_1 = arith.constant 0 : i32
    %c0_i32_2 = arith.constant 0 : i32
    return %arg0, %c0_i32_0, %2, %c0_i32_1 : i32, i32, i32, i32
  }
  func.func @transform_5(%arg0: i32, %arg1: i32, %arg2: i32) -> (i32, i32, i32, i32) {
    %c1_i32 = arith.constant 1 : i32
    %0 = arith.muli %arg1, %c1_i32 : i32
    %1 = arith.addi %0, %arg2 : i32
    %c0_i32 = arith.constant 0 : i32
    %2 = arith.minsi %1, %c0_i32 : i32
    %c0_i32_0 = arith.constant 0 : i32
    %c0_i32_1 = arith.constant 0 : i32
    %c0_i32_2 = arith.constant 0 : i32
    return %arg0, %c0_i32_0, %2, %c0_i32_1 : i32, i32, i32, i32
  }
  func.func @transform_6(%arg0: i32, %arg1: i32, %arg2: i32) -> (i32, i32, i32, i32, i32) {
    %c0_i32 = arith.constant 0 : i32
    %c0_i32_0 = arith.constant 0 : i32
    %c0_i32_1 = arith.constant 0 : i32
    %c0_i32_2 = arith.constant 0 : i32
    return %arg0, %arg1, %c0_i32, %c0_i32_0, %c0_i32_1 : i32, i32, i32, i32, i32
  }
  func.func @transform_7(%arg0: i32, %arg1: i32, %arg2: i32) -> (i32, i32, i32, i32) {
    %c0_i32 = arith.constant 0 : i32
    %c0_i32_0 = arith.constant 0 : i32
    %c0_i32_1 = arith.constant 0 : i32
    return %arg0, %arg1, %c0_i32, %c0_i32_0 : i32, i32, i32, i32
  }
  func.func @transform_8(%arg0: i32, %arg1: i32, %arg2: i32) -> (i32, i32, i32, i32, i32) {
    %c0_i32 = arith.constant 0 : i32
    %c0_i32_0 = arith.constant 0 : i32
    %c0_i32_1 = arith.constant 0 : i32
    %c0_i32_2 = arith.constant 0 : i32
    return %arg0, %arg1, %c0_i32, %c0_i32_0, %c0_i32_1 : i32, i32, i32, i32, i32
  }
}

</mosaic_0001>

<llo_original>
// kernel: hover_loss.1
$region0: #{hover_loss.1}
  #allocation0 [shape = 'u32[]', space=smem, size = 0x4, offset = 0x4, fixed_abs, tag = 'smem constant byte address 0x4 - core index']
  #allocation1 [shape = 'u32[144,128]{1,0:T(1,128)}', space=vmem, size = 0x12000, scoped, tag = 'internal scratch']
  #allocation2 [shape = 'f32[2,2,128]{2,1,0:T(2,128)}', space=vmem, size = 0x800, scoped, tag = 'scratch operand']
  #allocation3 [shape = 'f32[2,2,128]{2,1,0:T(2,128)}', space=vmem, size = 0x800, scoped, tag = 'scratch operand']
  #allocation4 [shape = 'f32[2,2,128]{2,1,0:T(2,128)}', space=vmem, size = 0x800, scoped, tag = 'scratch operand']
  #allocation5 [shape = 'f32[2,2,128]{2,1,0:T(2,128)}', space=vmem, size = 0x800, scoped, tag = 'scratch operand']
  #allocation6 [shape = 'f32[5,2,128]{2,1,0:T(2,128)}', space=vmem, size = 0x1400, scoped, tag = 'scratch operand']
  #allocation7 [shape = 'f32[5,2,128]{2,1,0:T(2,128)}', space=vmem, size = 0x1400, scoped, tag = 'scratch operand']
  #allocation8 [shape = 'f32[5,2,128]{2,1,0:T(2,128)}', space=vmem, size = 0x1400, scoped, tag = 'scratch operand']
  #allocation9 [shape = 'f32[5,2,128]{2,1,0:T(2,128)}', space=vmem, size = 0x1400, scoped, tag = 'scratch operand']
  #allocation10 [shape = 'f32[2,128]{1,0:T(2,128)}', space=vmem, size = 0x400, scoped, tag = 'scratch operand']
  %s0 = inlined_call_operand.vmem [shape: f32[2,2,2,128], index: 0, kind: input, shape index: {}]
  %s1 = inlined_call_operand.vmem [shape: s32[2,1,2,128], index: 1, kind: input, shape index: {}]
  %s2 = inlined_call_operand.vmem [shape: f32[2,2,2,128], index: 2, kind: input, shape index: {}]
  %s3 = inlined_call_operand.vmem [shape: f32[2,2,2,128], index: 3, kind: input, shape index: {}]
  %s4 = inlined_call_operand.vmem [shape: f32[2,5,2,128], index: 4, kind: input, shape index: {}]
  %s5 = inlined_call_operand.vmem [shape: s32[2,1,2,128], index: 5, kind: input, shape index: {}]
  %s6 = inlined_call_operand.vmem [shape: f32[2,1,4,2,128], index: 6, kind: output, shape index: {0}]
  %s7 = inlined_call_operand.vmem [shape: f32[2,1,1,128], index: 7, kind: output, shape index: {1}]
  %s8 = inlined_call_operand.vmem [shape: f32[2,1,4,5,128], index: 8, kind: output, shape index: {2}]
  %9 = xla_tuple %s6, %s7, %s8
  %s10 = sld [smem:[#allocation0]]
  $region81: #{hover_loss.1} parent=0
    _
  %s12 = ssub.s32 1, %s10
  %s13 = scalar_select 0, %s12, %s10
  loop: start=0, step=1, limit=4
  $region2: #{hover_loss.1} parent=0 // loop_pre_header
    _
  $region3: #{hover_loss.1} parent=0 // loop_header
    %s15 = sphi 0, %s19
    %p16 = scmp.ge.s32.totalorder %s15, 4
    %s22 = sphi 0, %s41
    %s23 = sphi 0, %s37
    %s24 = sphi 0, %s33
    %s25 = sphi 0, %s22
    %s26 = sphi 0, %s23
    %s27 = sphi 0, %s24
    %s28 = sphi 0, %s25
    %s29 = sphi 0, %s26
    %s30 = sphi 0, %s27
    %s52 = sphi 0, %s54
    %s55 = sphi 0, %s52
    %s56 = sphi 0, %s55
    %s72 = sphi 0, %s56
    %s86 = sphi 0, %s88
    %s89 = sphi 0, %s86
    %s90 = sphi 0, %s89
    %s106 = sphi 0, %s90
    %s120 = sphi 0, %s122
    %s123 = sphi 0, %s120
    %s124 = sphi 0, %s123
    %s140 = sphi 0, %s124
    %s154 = sphi 0, %s156
    %s157 = sphi 0, %s154
    %s158 = sphi 0, %s157
    %s174 = sphi 0, %s158
    %s188 = sphi 0, %s190
    %s191 = sphi 0, %s188
    %s192 = sphi 0, %s191
    %s208 = sphi 0, %s192
    %s222 = sphi 0, %s224
    %s225 = sphi 0, %s222
    %s226 = sphi 0, %s225
    %s242 = sphi 0, %s226
    %s250 = sphi 0, %s252
    %s253 = sphi 0, %s250
    %s254 = sphi 0, %s253
    %s270 = sphi 0, %s254
    %s278 = sphi 0, %s280
    %s281 = sphi 0, %s278
    %s282 = sphi 0, %s281
    %s298 = sphi 0, %s282
    %s306 = sphi 0, %s308
    %s309 = sphi 0, %s306
    %s310 = sphi 0, %s309
    %s326 = sphi 0, %s310
  $region4: #{hover_loss.1} parent=0 // loop_header_branch
    %18 = sbr.rel (%p16) target = $region8
  $region5: #{hover_loss.1} parent=0 // loop_body
    %s20 = ssub.s32 %s15, 1
    %s21 = ssub.s32 %s15, 2
    %s31 = sadd.s32 1, %s24
    %p32 = scmp.ge.s32.totalorder %s31, 1
    %s33 = scalar_select %p32, 0, %s31
    %s34 = sadd.s32 1, %s23
    %s35 = scalar_select %p32, %s34, %s23
    %p36 = scmp.ge.s32.totalorder %s35, 1
    %s37 = scalar_select %p36, 0, %s35
    %s38 = sadd.s32 1, %s22
    %s39 = scalar_select %p36, %s38, %s22
    %p40 = scmp.ge.s32.totalorder %s39, 2
    %s41 = scalar_select %p40, 0, %s39
    %s42 = sadd.s32 %s23, %s24
    %p43 = scmp.lt.s32.totalorder %s42, 0
    %s44 = scalar_select %p43, %s42, 0
    %s45 = sadd.s32 %s37, %s33
    %p46 = scmp.lt.s32.totalorder %s45, 0
    %s47 = scalar_select %p46, %s45, 0
    %s48 = ssub.s32 %s22, %s41
    %s49 = ssub.s32 %s44, %s47
    %s50 = sor.u32 %s48, %s49
    %p51 = scmp.eq.s32.totalorder %s50, 0
    %s53 = sadd.s32 %s52, 1
    %s54 = scalar_select %p51, %s52, %s53
    %p57 = pneg %p51
    %p58 = scmp.eq.s32.totalorder %s15, 1
    %p59 = por %p57, %p58
    %p60 = scmp.ne.s32.totalorder %s52, %s55
    %p61 = scmp.eq.s32.totalorder %s15, 0
    %p62 = por %p60, %p61
    %p63 = scmp.ne.s32.totalorder %s52, %s55
    %p64 = scmp.eq.s32.totalorder %s20, 1
    %p65 = por %p63, %p64
    %p66 = scmp.ne.s32.totalorder %s55, %s56
    %p67 = scmp.eq.s32.totalorder %s20, 0
    %p68 = por %p66, %p67
    %p69 = scmp.ne.s32.totalorder %s55, %s56
    %p70 = scmp.eq.s32.totalorder %s21, 1
    %p71 = por %p69, %p70
    %p73 = scmp.ne.s32.totalorder %s56, %s72
    %p74 = scmp.eq.s32.totalorder %s21, 0
    %p75 = por %p73, %p74
    %s76 = sadd.s32 %s23, %s24
    %p77 = scmp.lt.s32.totalorder %s76, 0
    %s78 = scalar_select %p77, %s76, 0
    %s79 = sadd.s32 %s37, %s33
    %p80 = scmp.lt.s32.totalorder %s79, 0
    %s81 = scalar_select %p80, %s79, 0
    %s82 = ssub.s32 %s22, %s41
    %s83 = ssub.s32 %s78, %s81
    %s84 = sor.u32 %s82, %s83
    %p85 = scmp.eq.s32.totalorder %s84, 0
    %s87 = sadd.s32 %s86, 1
    %s88 = scalar_select %p85, %s86, %s87
    %p91 = pneg %p85
    %p92 = scmp.eq.s32.totalorder %s15, 1
    %p93 = por %p91, %p92
    %p94 = scmp.ne.s32.totalorder %s86, %s89
    %p95 = scmp.eq.s32.totalorder %s15, 0
    %p96 = por %p94, %p95
    %p97 = scmp.ne.s32.totalorder %s86, %s89
    %p98 = scmp.eq.s32.totalorder %s20, 1
    %p99 = por %p97, %p98
    %p100 = scmp.ne.s32.totalorder %s89, %s90
    %p101 = scmp.eq.s32.totalorder %s20, 0
    %p102 = por %p100, %p101
    %p103 = scmp.ne.s32.totalorder %s89, %s90
    %p104 = scmp.eq.s32.totalorder %s21, 1
    %p105 = por %p103, %p104
    %p107 = scmp.ne.s32.totalorder %s90, %s106
    %p108 = scmp.eq.s32.totalorder %s21, 0
    %p109 = por %p107, %p108
    %s110 = sadd.s32 %s23, %s24
    %p111 = scmp.lt.s32.totalorder %s110, 0
    %s112 = scalar_select %p111, %s110, 0
    %s113 = sadd.s32 %s37, %s33
    %p114 = scmp.lt.s32.totalorder %s113, 0
    %s115 = scalar_select %p114, %s113, 0
    %s116 = ssub.s32 %s22, %s41
    %s117 = ssub.s32 %s112, %s115
    %s118 = sor.u32 %s116, %s117
    %p119 = scmp.eq.s32.totalorder %s118, 0
    %s121 = sadd.s32 %s120, 1
    %s122 = scalar_select %p119, %s120, %s121
    %p125 = pneg %p119
    %p126 = scmp.eq.s32.totalorder %s15, 1
    %p127 = por %p125, %p126
    %p128 = scmp.ne.s32.totalorder %s120, %s123
    %p129 = scmp.eq.s32.totalorder %s15, 0
    %p130 = por %p128, %p129
    %p131 = scmp.ne.s32.totalorder %s120, %s123
    %p132 = scmp.eq.s32.totalorder %s20, 1
    %p133 = por %p131, %p132
    %p134 = scmp.ne.s32.totalorder %s123, %s124
    %p135 = scmp.eq.s32.totalorder %s20, 0
    %p136 = por %p134, %p135
    %p137 = scmp.ne.s32.totalorder %s123, %s124
    %p138 = scmp.eq.s32.totalorder %s21, 1
    %p139 = por %p137, %p138
    %p141 = scmp.ne.s32.totalorder %s124, %s140
    %p142 = scmp.eq.s32.totalorder %s21, 0
    %p143 = por %p141, %p142
    %s144 = sadd.s32 %s23, %s24
    %p145 = scmp.lt.s32.totalorder %s144, 0
    %s146 = scalar_select %p145, %s144, 0
    %s147 = sadd.s32 %s37, %s33
    %p148 = scmp.lt.s32.totalorder %s147, 0
    %s149 = scalar_select %p148, %s147, 0
    %s150 = ssub.s32 %s22, %s41
    %s151 = ssub.s32 %s146, %s149
    %s152 = sor.u32 %s150, %s151
    %p153 = scmp.eq.s32.totalorder %s152, 0
    %s155 = sadd.s32 %s154, 1
    %s156 = scalar_select %p153, %s154, %s155
    %p159 = pneg %p153
    %p160 = scmp.eq.s32.totalorder %s15, 1
    %p161 = por %p159, %p160
    %p162 = scmp.ne.s32.totalorder %s154, %s157
    %p163 = scmp.eq.s32.totalorder %s15, 0
    %p164 = por %p162, %p163
    %p165 = scmp.ne.s32.totalorder %s154, %s157
    %p166 = scmp.eq.s32.totalorder %s20, 1
    %p167 = por %p165, %p166
    %p168 = scmp.ne.s32.totalorder %s157, %s158
    %p169 = scmp.eq.s32.totalorder %s20, 0
    %p170 = por %p168, %p169
    %p171 = scmp.ne.s32.totalorder %s157, %s158
    %p172 = scmp.eq.s32.totalorder %s21, 1
    %p173 = por %p171, %p172
    %p175 = scmp.ne.s32.totalorder %s158, %s174
    %p176 = scmp.eq.s32.totalorder %s21, 0
    %p177 = por %p175, %p176
    %s178 = sadd.s32 %s23, %s24
    %p179 = scmp.lt.s32.totalorder %s178, 0
    %s180 = scalar_select %p179, %s178, 0
    %s181 = sadd.s32 %s37, %s33
    %p182 = scmp.lt.s32.totalorder %s181, 0
    %s183 = scalar_select %p182, %s181, 0
    %s184 = ssub.s32 %s22, %s41
    %s185 = ssub.s32 %s180, %s183
    %s186 = sor.u32 %s184, %s185
    %p187 = scmp.eq.s32.totalorder %s186, 0
    %s189 = sadd.s32 %s188, 1
    %s190 = scalar_select %p187, %s188, %s189
    %p193 = pneg %p187
    %p194 = scmp.eq.s32.totalorder %s15, 1
    %p195 = por %p193, %p194
    %p196 = scmp.ne.s32.totalorder %s188, %s191
    %p197 = scmp.eq.s32.totalorder %s15, 0
    %p198 = por %p196, %p197
    %p199 = scmp.ne.s32.totalorder %s188, %s191
    %p200 = scmp.eq.s32.totalorder %s20, 1
    %p201 = por %p199, %p200
    %p202 = scmp.ne.s32.totalorder %s191, %s192
    %p203 = scmp.eq.s32.totalorder %s20, 0
    %p204 = por %p202, %p203
    %p205 = scmp.ne.s32.totalorder %s191, %s192
    %p206 = scmp.eq.s32.totalorder %s21, 1
    %p207 = por %p205, %p206
    %p209 = scmp.ne.s32.totalorder %s192, %s208
    %p210 = scmp.eq.s32.totalorder %s21, 0
    %p211 = por %p209, %p210
    %s212 = sadd.s32 %s23, %s24
    %p213 = scmp.lt.s32.totalorder %s212, 0
    %s214 = scalar_select %p213, %s212, 0
    %s215 = sadd.s32 %s37, %s33
    %p216 = scmp.lt.s32.totalorder %s215, 0
    %s217 = scalar_select %p216, %s215, 0
    %s218 = ssub.s32 %s22, %s41
    %s219 = ssub.s32 %s214, %s217
    %s220 = sor.u32 %s218, %s219
    %p221 = scmp.eq.s32.totalorder %s220, 0
    %s223 = sadd.s32 %s222, 1
    %s224 = scalar_select %p221, %s222, %s223
    %p227 = pneg %p221
    %p228 = scmp.eq.s32.totalorder %s15, 1
    %p229 = por %p227, %p228
    %p230 = scmp.ne.s32.totalorder %s222, %s225
    %p231 = scmp.eq.s32.totalorder %s15, 0
    %p232 = por %p230, %p231
    %p233 = scmp.ne.s32.totalorder %s222, %s225
    %p234 = scmp.eq.s32.totalorder %s20, 1
    %p235 = por %p233, %p234
    %p236 = scmp.ne.s32.totalorder %s225, %s226
    %p237 = scmp.eq.s32.totalorder %s20, 0
    %p238 = por %p236, %p237
    %p239 = scmp.ne.s32.totalorder %s225, %s226
    %p240 = scmp.eq.s32.totalorder %s21, 1
    %p241 = por %p239, %p240
    %p243 = scmp.ne.s32.totalorder %s226, %s242
    %p244 = scmp.eq.s32.totalorder %s21, 0
    %p245 = por %p243, %p244
    %s246 = ssub.s32 %s22, %s41
    %s247 = ssub.s32 %s23, %s37
    %s248 = sor.u32 %s246, %s247
    %p249 = scmp.eq.s32.totalorder %s248, 0
    %s251 = sadd.s32 %s250, 1
    %s252 = scalar_select %p249, %s250, %s251
    %p255 = pneg %p249
    %p256 = scmp.eq.s32.totalorder %s15, 1
    %p257 = por %p255, %p256
    %p258 = scmp.ne.s32.totalorder %s250, %s253
    %p259 = scmp.eq.s32.totalorder %s15, 0
    %p260 = por %p258, %p259
    %p261 = scmp.ne.s32.totalorder %s250, %s253
    %p262 = scmp.eq.s32.totalorder %s20, 1
    %p263 = por %p261, %p262
    %p264 = scmp.ne.s32.totalorder %s253, %s254
    %p265 = scmp.eq.s32.totalorder %s20, 0
    %p266 = por %p264, %p265
    %p267 = scmp.ne.s32.totalorder %s253, %s254
    %p268 = scmp.eq.s32.totalorder %s21, 1
    %p269 = por %p267, %p268
    %p271 = scmp.ne.s32.totalorder %s254, %s270
    %p272 = scmp.eq.s32.totalorder %s21, 0
    %p273 = por %p271, %p272
    %s274 = ssub.s32 %s22, %s41
    %s275 = ssub.s32 %s23, %s37
    %s276 = sor.u32 %s274, %s275
    %p277 = scmp.eq.s32.totalorder %s276, 0
    %s279 = sadd.s32 %s278, 1
    %s280 = scalar_select %p277, %s278, %s279
    %p283 = pneg %p277
    %p284 = scmp.eq.s32.totalorder %s15, 1
    %p285 = por %p283, %p284
    %p286 = scmp.ne.s32.totalorder %s278, %s281
    %p287 = scmp.eq.s32.totalorder %s15, 0
    %p288 = por %p286, %p287
    %p289 = scmp.ne.s32.totalorder %s278, %s281
    %p290 = scmp.eq.s32.totalorder %s20, 1
    %p291 = por %p289, %p290
    %p292 = scmp.ne.s32.totalorder %s281, %s282
    %p293 = scmp.eq.s32.totalorder %s20, 0
    %p294 = por %p292, %p293
    %p295 = scmp.ne.s32.totalorder %s281, %s282
    %p296 = scmp.eq.s32.totalorder %s21, 1
    %p297 = por %p295, %p296
    %p299 = scmp.ne.s32.totalorder %s282, %s298
    %p300 = scmp.eq.s32.totalorder %s21, 0
    %p301 = por %p299, %p300
    %s302 = ssub.s32 %s22, %s41
    %s303 = ssub.s32 %s23, %s37
    %s304 = sor.u32 %s302, %s303
    %p305 = scmp.eq.s32.totalorder %s304, 0
    %s307 = sadd.s32 %s306, 1
    %s308 = scalar_select %p305, %s306, %s307
    %p311 = pneg %p305
    %p312 = scmp.eq.s32.totalorder %s15, 1
    %p313 = por %p311, %p312
    %p314 = scmp.ne.s32.totalorder %s306, %s309
    %p315 = scmp.eq.s32.totalorder %s15, 0
    %p316 = por %p314, %p315
    %p317 = scmp.ne.s32.totalorder %s306, %s309
    %p318 = scmp.eq.s32.totalorder %s20, 1
    %p319 = por %p317, %p318
    %p320 = scmp.ne.s32.totalorder %s309, %s310
    %p321 = scmp.eq.s32.totalorder %s20, 0
    %p322 = por %p320, %p321
    %p323 = scmp.ne.s32.totalorder %s309, %s310
    %p324 = scmp.eq.s32.totalorder %s21, 1
    %p325 = por %p323, %p324
    %p327 = scmp.ne.s32.totalorder %s310, %s326
    %p328 = scmp.eq.s32.totalorder %s21, 0
    %p329 = por %p327, %p328
    %p330 = scmp.le.s32.totalorder 1, %s15
    %p331 = scmp.lt.s32.totalorder %s15, 3
    %p332 = pnand %p330, %p331
    %p333 = pneg %p332
    // Predicated region
    $region9: #{hover_loss.1} parent=5 // pred_check
      _
    $region10: #{hover_loss.1} parent=5 // pred_check_branch
      %335 = sbr.rel (%p332) target = $region12
    $region11: #{hover_loss.1} parent=5 // pred_region
      %s336 = ssub.s32 %s15, 1
    $region12: #{hover_loss.1} parent=5 // pred_fallthru
      _
    %p337 = scmp.lt.s32.totalorder %s15, 2
    // Predicated region
    $region13: #{hover_loss.1} parent=5 // pred_check
      %p338 = pneg %p337
    $region14: #{hover_loss.1} parent=5 // pred_check_branch
      %340 = sbr.rel (%p338) target = $region16
    $region15: #{hover_loss.1} parent=5 // pred_region
      // Predicated region
      $region17: #{hover_loss.1} parent=15 // pred_check
        %p341 = pneg %p62
      $region18: #{hover_loss.1} parent=15 // pred_check_branch
        %343 = sbr.rel (%p341) target = $region20
      $region19: #{hover_loss.1} parent=15 // pred_region
        %s344 = sadd.s32 %s23, %s24
        %p345 = scmp.lt.s32.totalorder %s344, 0
        %s346 = scalar_select %p345, %s344, 0
        %p347 = scmp.lt.s32.totalorder %s22, 1
        %s348 = scalar_select %p347, %s22, 1
        %p349 = scmp.lt.s32.totalorder %s346, 0
        %s350 = scalar_select %p349, %s346, 0
        %s351 = smul.addr %s348, 2
        %s352 = sadd.s32 %s350, %s351
        %s353 = smul.addr %s352, 2
        %s354 = scalar_lea.vmem %s0, %s353
        %s355 = sadd.s32 %s23, %s24
        %p356 = scmp.lt.s32.totalorder %s355, 0
        %s357 = scalar_select %p356, %s355, 0
      $region20: #{hover_loss.1} parent=15 // pred_fallthru
        _
      // Predicated region
      $region21: #{hover_loss.1} parent=15 // pred_check
        %p358 = pneg %p96
      $region22: #{hover_loss.1} parent=15 // pred_check_branch
        %360 = sbr.rel (%p358) target = $region24
      $region23: #{hover_loss.1} parent=15 // pred_region
        %s361 = sadd.s32 %s23, %s24
        %p362 = scmp.lt.s32.totalorder %s361, 0
        %s363 = scalar_select %p362, %s361, 0
        %p364 = scmp.lt.s32.totalorder %s22, 1
        %s365 = scalar_select %p364, %s22, 1
        %p366 = scmp.lt.s32.totalorder %s363, 0
        %s367 = scalar_select %p366, %s363, 0
        %s368 = sadd.s32 %s367, %s365
        %s369 = smul.addr %s368, 2
        %s370 = scalar_lea.vmem %s1, %s369
        %s371 = sadd.s32 %s23, %s24
        %p372 = scmp.lt.s32.totalorder %s371, 0
        %s373 = scalar_select %p372, %s371, 0
      $region24: #{hover_loss.1} parent=15 // pred_fallthru
        _
      // Predicated region
      $region25: #{hover_loss.1} parent=15 // pred_check
        %p374 = pneg %p130
      $region26: #{hover_loss.1} parent=15 // pred_check_branch
        %376 = sbr.rel (%p374) target = $region28
      $region27: #{hover_loss.1} parent=15 // pred_region
        %s377 = sadd.s32 %s23, %s24
        %p378 = scmp.lt.s32.totalorder %s377, 0
        %s379 = scalar_select %p378, %s377, 0
        %p380 = scmp.lt.s32.totalorder %s22, 1
        %s381 = scalar_select %p380, %s22, 1
        %p382 = scmp.lt.s32.totalorder %s379, 0
        %s383 = scalar_select %p382, %s379, 0
        %s384 = smul.addr %s381, 2
        %s385 = sadd.s32 %s383, %s384
        %s386 = smul.addr %s385, 2
        %s387 = scalar_lea.vmem %s2, %s386
        %s388 = sadd.s32 %s23, %s24
        %p389 = scmp.lt.s32.totalorder %s388, 0
        %s390 = scalar_select %p389, %s388, 0
      $region28: #{hover_loss.1} parent=15 // pred_fallthru
        _
      // Predicated region
      $region29: #{hover_loss.1} parent=15 // pred_check
        %p391 = pneg %p164
      $region30: #{hover_loss.1} parent=15 // pred_check_branch
        %393 = sbr.rel (%p391) target = $region32
      $region31: #{hover_loss.1} parent=15 // pred_region
        %s394 = sadd.s32 %s23, %s24
        %p395 = scmp.lt.s32.totalorder %s394, 0
        %s396 = scalar_select %p395, %s394, 0
        %p397 = scmp.lt.s32.totalorder %s22, 1
        %s398 = scalar_select %p397, %s22, 1
        %p399 = scmp.lt.s32.totalorder %s396, 0
        %s400 = scalar_select %p399, %s396, 0
        %s401 = smul.addr %s398, 2
        %s402 = sadd.s32 %s400, %s401
        %s403 = smul.addr %s402, 2
        %s404 = scalar_lea.vmem %s3, %s403
        %s405 = sadd.s32 %s23, %s24
        %p406 = scmp.lt.s32.totalorder %s405, 0
        %s407 = scalar_select %p406, %s405, 0
      $region32: #{hover_loss.1} parent=15 // pred_fallthru
        _
      // Predicated region
      $region33: #{hover_loss.1} parent=15 // pred_check
        %p408 = pneg %p198
      $region34: #{hover_loss.1} parent=15 // pred_check_branch
        %410 = sbr.rel (%p408) target = $region36
      $region35: #{hover_loss.1} parent=15 // pred_region
        %s411 = sadd.s32 %s23, %s24
        %p412 = scmp.lt.s32.totalorder %s411, 0
        %s413 = scalar_select %p412, %s411, 0
        %p414 = scmp.lt.s32.totalorder %s22, 1
        %s415 = scalar_select %p414, %s22, 1
        %p416 = scmp.lt.s32.totalorder %s413, 0
        %s417 = scalar_select %p416, %s413, 0
        %s418 = smul.addr %s415, 5
        %s419 = sadd.s32 %s417, %s418
        %s420 = smul.addr %s419, 2
        %s421 = scalar_lea.vmem %s4, %s420
        %s422 = sadd.s32 %s23, %s24
        %p423 = scmp.lt.s32.totalorder %s422, 0
        %s424 = scalar_select %p423, %s422, 0
      $region36: #{hover_loss.1} parent=15 // pred_fallthru
        _
      // Predicated region
      $region37: #{hover_loss.1} parent=15 // pred_check
        %p425 = pneg %p232
      $region38: #{hover_loss.1} parent=15 // pred_check_branch
        %427 = sbr.rel (%p425) target = $region40
      $region39: #{hover_loss.1} parent=15 // pred_region
        %s428 = sadd.s32 %s23, %s24
        %p429 = scmp.lt.s32.totalorder %s428, 0
        %s430 = scalar_select %p429, %s428, 0
        %p431 = scmp.lt.s32.totalorder %s22, 1
        %s432 = scalar_select %p431, %s22, 1
        %p433 = scmp.lt.s32.totalorder %s430, 0
        %s434 = scalar_select %p433, %s430, 0
        %s435 = sadd.s32 %s434, %s432
        %s436 = smul.addr %s435, 2
        %s437 = scalar_lea.vmem %s5, %s436
        %s438 = sadd.s32 %s23, %s24
        %p439 = scmp.lt.s32.totalorder %s438, 0
        %s440 = scalar_select %p439, %s438, 0
      $region40: #{hover_loss.1} parent=15 // pred_fallthru
        _
    $region16: #{hover_loss.1} parent=5 // pred_fallthru
      _
    %p441 = scmp.le.s32.totalorder 1, %s15
    %p442 = scmp.lt.s32.totalorder %s15, 3
    %p443 = pnand %p441, %p442
    %p444 = pneg %p443
    // Predicated region
    $region41: #{hover_loss.1} parent=5 // pred_check
      _
    $region42: #{hover_loss.1} parent=5 // pred_check_branch
      %446 = sbr.rel (%p443) target = $region44
    $region43: #{hover_loss.1} parent=5 // pred_region
      %s447 = ssub.s32 %s15, 1
      %s448 = sadd.s32 %s26, %s27
      %p449 = scmp.lt.s32.totalorder %s448, 0
      %s450 = scalar_select %p449, %s448, 0
      %p451 = scmp.lt.s32.totalorder %s25, 1
      %s452 = scalar_select %p451, %s25, 1
      %p453 = scmp.lt.s32.totalorder %s450, 0
      %s454 = scalar_select %p453, %s450, 0
      %s455 = smul.addr %s452, 2
      %s456 = sadd.s32 %s454, %s455
      %s457 = smul.addr %s456, 2
      %s458 = scalar_lea.vmem %s0, %s457
      %p459 = pneg %p68
      %p460 = pneg %p65
      %s461 = sadd.s32 %s26, %s27
      %p462 = scmp.lt.s32.totalorder %s461, 0
      %s463 = scalar_select %p462, %s461, 0
      %p464 = scmp.lt.s32.totalorder %s25, 1
      %s465 = scalar_select %p464, %s25, 1
      %p466 = scmp.lt.s32.totalorder %s463, 0
      %s467 = scalar_select %p466, %s463, 0
      %s468 = sadd.s32 %s467, %s465
      %s469 = smul.addr %s468, 2
      %s470 = scalar_lea.vmem %s1, %s469
      %p471 = pneg %p102
      %p472 = pneg %p99
      %s473 = sadd.s32 %s26, %s27
      %p474 = scmp.lt.s32.totalorder %s473, 0
      %s475 = scalar_select %p474, %s473, 0
      %p476 = scmp.lt.s32.totalorder %s25, 1
      %s477 = scalar_select %p476, %s25, 1
      %p478 = scmp.lt.s32.totalorder %s475, 0
      %s479 = scalar_select %p478, %s475, 0
      %s480 = smul.addr %s477, 2
      %s481 = sadd.s32 %s479, %s480
      %s482 = smul.addr %s481, 2
      %s483 = scalar_lea.vmem %s2, %s482
      %p484 = pneg %p136
      %p485 = pneg %p133
      %s486 = sadd.s32 %s26, %s27
      %p487 = scmp.lt.s32.totalorder %s486, 0
      %s488 = scalar_select %p487, %s486, 0
      %p489 = scmp.lt.s32.totalorder %s25, 1
      %s490 = scalar_select %p489, %s25, 1
      %p491 = scmp.lt.s32.totalorder %s488, 0
      %s492 = scalar_select %p491, %s488, 0
      %s493 = smul.addr %s490, 2
      %s494 = sadd.s32 %s492, %s493
      %s495 = smul.addr %s494, 2
      %s496 = scalar_lea.vmem %s3, %s495
      %p497 = pneg %p170
      %p498 = pneg %p167
      %s499 = sadd.s32 %s26, %s27
      %p500 = scmp.lt.s32.totalorder %s499, 0
      %s501 = scalar_select %p500, %s499, 0
      %p502 = scmp.lt.s32.totalorder %s25, 1
      %s503 = scalar_select %p502, %s25, 1
      %p504 = scmp.lt.s32.totalorder %s501, 0
      %s505 = scalar_select %p504, %s501, 0
      %s506 = smul.addr %s503, 5
      %s507 = sadd.s32 %s505, %s506
      %s508 = smul.addr %s507, 2
      %s509 = scalar_lea.vmem %s4, %s508
      %p510 = pneg %p204
      %p511 = pneg %p201
      %s512 = sadd.s32 %s26, %s27
      %p513 = scmp.lt.s32.totalorder %s512, 0
      %s514 = scalar_select %p513, %s512, 0
      %p515 = scmp.lt.s32.totalorder %s25, 1
      %s516 = scalar_select %p515, %s25, 1
      %p517 = scmp.lt.s32.totalorder %s514, 0
      %s518 = scalar_select %p517, %s514, 0
      %s519 = sadd.s32 %s518, %s516
      %s520 = smul.addr %s519, 2
      %s521 = scalar_lea.vmem %s5, %s520
      %p522 = pneg %p238
      %p523 = pneg %p235
      %p524 = pneg %p266
      %p525 = pneg %p263
      %p526 = scmp.lt.s32.totalorder %s25, 1
      %s527 = scalar_select %p526, %s25, 1
      %p528 = scmp.lt.s32.totalorder %s26, 0
      %s529 = scalar_select %p528, %s26, 0
      %s530 = smul.addr %s529, 4
      %s531 = smul.addr %s527, 4
      %s532 = sadd.s32 %s530, %s531
      %s533 = smul.addr %s532, 2
      %s534 = scalar_lea.vmem %s6, %s533
      %p535 = pneg %p294
      %p536 = pneg %p291
      %p537 = scmp.lt.s32.totalorder %s25, 1
      %s538 = scalar_select %p537, %s25, 1
      %p539 = scmp.lt.s32.totalorder %s26, 0
      %s540 = scalar_select %p539, %s26, 0
      %s541 = sadd.s32 %s540, %s538
      %s542 = scalar_lea.vmem %s7, %s541
      %p543 = pneg %p322
      %p544 = pneg %p319
      %p545 = scmp.lt.s32.totalorder %s25, 1
      %s546 = scalar_select %p545, %s25, 1
      %p547 = scmp.lt.s32.totalorder %s26, 0
      %s548 = scalar_select %p547, %s26, 0
      %s549 = smul.addr %s548, 4
      %s550 = smul.addr %s546, 4
      %s551 = sadd.s32 %s549, %s550
      %s552 = smul.addr %s551, 8
      %s553 = scalar_lea.vmem %s8, %s552
      %s554 = sadd.s32 %s26, %s27
      %p555 = scmp.lt.s32.totalorder %s554, 0
      %s556 = scalar_select %p555, %s554, 0
      %p557 = scmp.lt.s32.totalorder %s25, 1
      %s558 = scalar_select %p557, %s25, 1
      %p559 = scmp.lt.s32.totalorder %s556, 0
      %s560 = scalar_select %p559, %s556, 0
      %s561 = smul.addr %s558, 2
      %s562 = sadd.s32 %s560, %s561
      %s563 = smul.addr %s562, 2
      %s564 = scalar_lea.vmem %s0, %s563
      %s565 = sadd.s32 %s26, %s27
      %p566 = scmp.lt.s32.totalorder %s565, 0
      %s567 = scalar_select %p566, %s565, 0
      %s568 = sadd.s32 %s26, %s27
      %p569 = scmp.lt.s32.totalorder %s568, 0
      %s570 = scalar_select %p569, %s568, 0
      %p571 = scmp.lt.s32.totalorder %s25, 1
      %s572 = scalar_select %p571, %s25, 1
      %p573 = scmp.lt.s32.totalorder %s570, 0
      %s574 = scalar_select %p573, %s570, 0
      %s575 = sadd.s32 %s574, %s572
      %s576 = smul.addr %s575, 2
      %s577 = scalar_lea.vmem %s1, %s576
      %s578 = sadd.s32 %s26, %s27
      %p579 = scmp.lt.s32.totalorder %s578, 0
      %s580 = scalar_select %p579, %s578, 0
      %s581 = sadd.s32 %s26, %s27
      %p582 = scmp.lt.s32.totalorder %s581, 0
      %s583 = scalar_select %p582, %s581, 0
      %p584 = scmp.lt.s32.totalorder %s25, 1
      %s585 = scalar_select %p584, %s25, 1
      %p586 = scmp.lt.s32.totalorder %s583, 0
      %s587 = scalar_select %p586, %s583, 0
      %s588 = smul.addr %s585, 2
      %s589 = sadd.s32 %s587, %s588
      %s590 = smul.addr %s589, 2
      %s591 = scalar_lea.vmem %s2, %s590
      %s592 = sadd.s32 %s26, %s27
      %p593 = scmp.lt.s32.totalorder %s592, 0
      %s594 = scalar_select %p593, %s592, 0
      %s595 = sadd.s32 %s26, %s27
      %p596 = scmp.lt.s32.totalorder %s595, 0
      %s597 = scalar_select %p596, %s595, 0
      %p598 = scmp.lt.s32.totalorder %s25, 1
      %s599 = scalar_select %p598, %s25, 1
      %p600 = scmp.lt.s32.totalorder %s597, 0
      %s601 = scalar_select %p600, %s597, 0
      %s602 = smul.addr %s599, 2
      %s603 = sadd.s32 %s601, %s602
      %s604 = smul.addr %s603, 2
      %s605 = scalar_lea.vmem %s3, %s604
      %s606 = sadd.s32 %s26, %s27
      %p607 = scmp.lt.s32.totalorder %s606, 0
      %s608 = scalar_select %p607, %s606, 0
      %s609 = sadd.s32 %s26, %s27
      %p610 = scmp.lt.s32.totalorder %s609, 0
      %s611 = scalar_select %p610, %s609, 0
      %p612 = scmp.lt.s32.totalorder %s25, 1
      %s613 = scalar_select %p612, %s25, 1
      %p614 = scmp.lt.s32.totalorder %s611, 0
      %s615 = scalar_select %p614, %s611, 0
      %s616 = smul.addr %s613, 5
      %s617 = sadd.s32 %s615, %s616
      %s618 = smul.addr %s617, 2
      %s619 = scalar_lea.vmem %s4, %s618
      %s620 = sadd.s32 %s26, %s27
      %p621 = scmp.lt.s32.totalorder %s620, 0
      %s622 = scalar_select %p621, %s620, 0
      %s623 = sadd.s32 %s26, %s27
      %p624 = scmp.lt.s32.totalorder %s623, 0
      %s625 = scalar_select %p624, %s623, 0
      %p626 = scmp.lt.s32.totalorder %s25, 1
      %s627 = scalar_select %p626, %s25, 1
      %p628 = scmp.lt.s32.totalorder %s625, 0
      %s629 = scalar_select %p628, %s625, 0
      %s630 = sadd.s32 %s629, %s627
      %s631 = smul.addr %s630, 2
      %s632 = scalar_lea.vmem %s5, %s631
      %s633 = sadd.s32 %s26, %s27
      %p634 = scmp.lt.s32.totalorder %s633, 0
      %s635 = scalar_select %p634, %s633, 0
      %p636 = scmp.lt.s32.totalorder %s25, 1
      %s637 = scalar_select %p636, %s25, 1
      %p638 = scmp.lt.s32.totalorder %s26, 0
      %s639 = scalar_select %p638, %s26, 0
      %s640 = smul.addr %s639, 4
      %s641 = smul.addr %s637, 4
      %s642 = sadd.s32 %s640, %s641
      %s643 = smul.addr %s642, 2
      %s644 = scalar_lea.vmem %s6, %s643
      %p645 = scmp.lt.s32.totalorder %s25, 1
      %s646 = scalar_select %p645, %s25, 1
      %p647 = scmp.lt.s32.totalorder %s26, 0
      %s648 = scalar_select %p647, %s26, 0
      %s649 = sadd.s32 %s648, %s646
      %s650 = scalar_lea.vmem %s7, %s649
      %p651 = scmp.lt.s32.totalorder %s25, 1
      %s652 = scalar_select %p651, %s25, 1
      %p653 = scmp.lt.s32.totalorder %s26, 0
      %s654 = scalar_select %p653, %s26, 0
      %s655 = smul.addr %s654, 4
      %s656 = smul.addr %s652, 4
      %s657 = sadd.s32 %s655, %s656
      %s658 = smul.addr %s657, 8
      %s659 = scalar_lea.vmem %s8, %s658
      %p660 = scmp.eq.s32.totalorder %s27, 0
      // Predicated region
      $region45: #{hover_loss.1} parent=43 // pred_check
        %p661 = pneg %p660
      $region46: #{hover_loss.1} parent=43 // pred_check_branch
        %663 = sbr.rel (%p661) target = $region48
      $region47: #{hover_loss.1} parent=43 // pred_region
        %664 = vst [vmem:[#allocation2] sm:$0x3] 0.0
        %665 = vst [vmem:[#allocation2 + $0x2] sm:$0x3] 0.0
        %666 = vst [vmem:[#allocation3] sm:$0x3] 0.0
        %667 = vst [vmem:[#allocation3 + $0x2] sm:$0x3] 0.0
        %668 = vst [vmem:[#allocation4] sm:$0x3] 0.0
        %669 = vst [vmem:[#allocation4 + $0x2] sm:$0x3] 0.0
        %670 = vst [vmem:[#allocation5] sm:$0x3] 0.0
        %671 = vst [vmem:[#allocation5 + $0x2] sm:$0x3] 0.0
        %672 = vst [vmem:[#allocation6] sm:$0x3] 0.0
        %673 = vst [vmem:[#allocation6 + $0x2] sm:$0x3] 0.0
        %674 = vst [vmem:[#allocation6 + $0x4] sm:$0x3] 0.0
        %675 = vst [vmem:[#allocation6 + $0x6] sm:$0x3] 0.0
        %676 = vst [vmem:[#allocation6 + $0x8] sm:$0x3] 0.0
        %677 = vst [vmem:[#allocation7] sm:$0x3] 0.0
        %678 = vst [vmem:[#allocation7 + $0x2] sm:$0x3] 0.0
        %679 = vst [vmem:[#allocation7 + $0x4] sm:$0x3] 0.0
        %680 = vst [vmem:[#allocation7 + $0x6] sm:$0x3] 0.0
        %681 = vst [vmem:[#allocation7 + $0x8] sm:$0x3] 0.0
        %682 = vst [vmem:[#allocation8] sm:$0x3] 0.0
        %683 = vst [vmem:[#allocation8 + $0x2] sm:$0x3] 0.0
        %684 = vst [vmem:[#allocation8 + $0x4] sm:$0x3] 0.0
        %685 = vst [vmem:[#allocation8 + $0x6] sm:$0x3] 0.0
        %686 = vst [vmem:[#allocation8 + $0x8] sm:$0x3] 0.0
        %687 = vst [vmem:[#allocation9] sm:$0x3] 0.0
        %688 = vst [vmem:[#allocation9 + $0x2] sm:$0x3] 0.0
        %689 = vst [vmem:[#allocation9 + $0x4] sm:$0x3] 0.0
        %690 = vst [vmem:[#allocation9 + $0x6] sm:$0x3] 0.0
        %691 = vst [vmem:[#allocation9 + $0x8] sm:$0x3] 0.0
        %692 = vst [vmem:[#allocation10] sm:$0x3] 0.0
      $region48: #{hover_loss.1} parent=43 // pred_fallthru
        _
      %v693 = vld [vmem:[%s564] sm:$0x3]
      %v694 = vld [vmem:[%s564 + $0x2] sm:$0x3]
      %v695 = vld [vmem:[%s577] sm:$0x3]
      %vm696 = vcmask 1041408
      %v697 = vsel %vm696, %v693, -inf
      %v698 = vsel %vm696, %v694, -inf
      %v699 = vmax.f32 %v697, %v698
      %v700 = vsub.f32 %v693, %v699
      %v701 = vsub.f32 %v694, %v699
      %v702 = vmul.f32 %v700, 1.442695
      %v703 = vpow.pop %v702
      %v704 = vmul.f32 %v701, 1.442695
      %v705 = vpow.pop %v704
      %v706 = vsel %vm696, %v703, 0.0
      %v707 = vsel %vm696, %v705, 0.0
      %v708 = vadd.f32 %v706, %v707
      %v709 = vrcp.pop %v708
      %v710 = vmul.f32 %v703, %v709
      %v711 = vmul.f32 %v705, %v709
      %v712 = vlog2.pop %v708
      %v713 = vmul.f32 %v712, 0.6931472
      %v714 = vsub.f32 %v713, %v700
      %v715 = vsub.f32 %v713, %v701
      %vm716 = vcmp.eq.s32.totalorder %v695, 0
      %vm717 = vcmp.eq.s32.totalorder %v695, 1
      %v718 = vld [vmem:[#allocation3] sm:$0x3]
      %v719 = vld [vmem:[#allocation3 + $0x2] sm:$0x3]
      %v720 = vadd.f32 %v718, %v710
      %v721 = vadd.f32 %v719, %v711
      %722 = vst [vmem:[#allocation3] sm:$0x3] %v720
      %723 = vst [vmem:[#allocation3 + $0x2] sm:$0x3] %v721
      %v724 = vld [vmem:[#allocation2] sm:$0x3]
      %v725 = vld [vmem:[#allocation2 + $0x2] sm:$0x3]
      %v726 = vsel %vm716, %v710, 0.0
      %v727 = vsel %vm717, %v711, 0.0
      %v728 = vadd.f32 %v724, %v726
      %v729 = vadd.f32 %v725, %v727
      %730 = vst [vmem:[#allocation2] sm:$0x3] %v728
      %731 = vst [vmem:[#allocation2 + $0x2] sm:$0x3] %v729
      %v732 = vld [vmem:[#allocation4] sm:$0x3]
      %v733 = vld [vmem:[#allocation4 + $0x2] sm:$0x3]
      %v734 = vsel %vm716, 1.0, 0.0
      %v735 = vsel %vm717, 1.0, 0.0
      %v736 = vadd.f32 %v732, %v734
      %v737 = vadd.f32 %v733, %v735
      %738 = vst [vmem:[#allocation4] sm:$0x3] %v736
      %739 = vst [vmem:[#allocation4 + $0x2] sm:$0x3] %v737
      %v740 = vld [vmem:[#allocation5] sm:$0x3]
      %v741 = vld [vmem:[#allocation5 + $0x2] sm:$0x3]
      %v742 = vsel %vm716, %v714, 0.0
      %v743 = vsel %vm717, %v715, 0.0
      %v744 = vadd.f32 %v740, %v742
      %v745 = vadd.f32 %v741, %v743
      %746 = vst [vmem:[#allocation5] sm:$0x3] %v744
      %747 = vst [vmem:[#allocation5 + $0x2] sm:$0x3] %v745
      %v748 = vld [vmem:[%s619] sm:$0x3]
      %v749 = vld [vmem:[%s619 + $0x2] sm:$0x3]
      %v750 = vld [vmem:[%s619 + $0x4] sm:$0x3]
      %v751 = vld [vmem:[%s619 + $0x6] sm:$0x3]
      %v752 = vld [vmem:[%s619 + $0x8] sm:$0x3]
      %v753 = vld [vmem:[%s632] sm:$0x3]
      %v754 = vsel %vm696, %v748, -inf
      %v755 = vsel %vm696, %v749, -inf
      %v756 = vsel %vm696, %v750, -inf
      %v757 = vsel %vm696, %v751, -inf
      %v758 = vsel %vm696, %v752, -inf
      %v759 = vmax.f32 %v754, %v758
      %v760 = vmax.f32 %v759, %v755
      %v761 = vmax.f32 %v756, %v757
      %v762 = vmax.f32 %v760, %v761
      %v763 = vsub.f32 %v748, %v762
      %v764 = vsub.f32 %v749, %v762
      %v765 = vsub.f32 %v750, %v762
      %v766 = vsub.f32 %v751, %v762
      %v767 = vsub.f32 %v752, %v762
      %v768 = vmul.f32 %v763, 1.442695
      %v769 = vpow.pop %v768
      %v770 = vmul.f32 %v764, 1.442695
      %v771 = vpow.pop %v770
      %v772 = vmul.f32 %v765, 1.442695
      %v773 = vpow.pop %v772
      %v774 = vmul.f32 %v766, 1.442695
      %v775 = vpow.pop %v774
      %v776 = vmul.f32 %v767, 1.442695
      %v777 = vpow.pop %v776
      %v778 = vsel %vm696, %v769, 0.0
      %v779 = vsel %vm696, %v771, 0.0
      %v780 = vadd.f32 %v778, %v779
      %v781 = vsel %vm696, %v773, 0.0
      %v782 = vadd.f32 %v780, %v781
      %v783 = vsel %vm696, %v775, 0.0
      %v784 = vadd.f32 %v782, %v783
      %v785 = vsel %vm696, %v777, 0.0
      %v786 = vadd.f32 %v784, %v785
      %v787 = vrcp.pop %v786
      %v788 = vmul.f32 %v769, %v787
      %v789 = vmul.f32 %v771, %v787
      %v790 = vmul.f32 %v773, %v787
      %v791 = vmul.f32 %v775, %v787
      %v792 = vmul.f32 %v777, %v787
      %v793 = vlog2.pop %v786
      %v794 = vmul.f32 %v793, 0.6931472
      %v795 = vsub.f32 %v794, %v763
      %v796 = vsub.f32 %v794, %v764
      %v797 = vsub.f32 %v794, %v765
      %v798 = vsub.f32 %v794, %v766
      %v799 = vsub.f32 %v794, %v767
      %vm800 = vcmp.eq.s32.totalorder %v753, 0
      %vm801 = vcmp.eq.s32.totalorder %v753, 1
      %vm802 = vcmp.eq.s32.totalorder %v753, 2
      %vm803 = vcmp.eq.s32.totalorder %v753, 3
      %vm804 = vcmp.eq.s32.totalorder %v753, 4
      %v805 = vld [vmem:[#allocation7] sm:$0x3]
      %v806 = vld [vmem:[#allocation7 + $0x2] sm:$0x3]
      %v807 = vld [vmem:[#allocation7 + $0x4] sm:$0x3]
      %v808 = vld [vmem:[#allocation7 + $0x6] sm:$0x3]
      %v809 = vld [vmem:[#allocation7 + $0x8] sm:$0x3]
      %v810 = vadd.f32 %v805, %v788
      %v811 = vadd.f32 %v806, %v789
      %v812 = vadd.f32 %v807, %v790
      %v813 = vadd.f32 %v808, %v791
      %v814 = vadd.f32 %v809, %v792
      %815 = vst [vmem:[#allocation7] sm:$0x3] %v810
      %816 = vst [vmem:[#allocation7 + $0x2] sm:$0x3] %v811
      %817 = vst [vmem:[#allocation7 + $0x4] sm:$0x3] %v812
      %818 = vst [vmem:[#allocation7 + $0x6] sm:$0x3] %v813
      %819 = vst [vmem:[#allocation7 + $0x8] sm:$0x3] %v814
      %v820 = vld [vmem:[#allocation6] sm:$0x3]
      %v821 = vld [vmem:[#allocation6 + $0x2] sm:$0x3]
      %v822 = vld [vmem:[#allocation6 + $0x4] sm:$0x3]
      %v823 = vld [vmem:[#allocation6 + $0x6] sm:$0x3]
      %v824 = vld [vmem:[#allocation6 + $0x8] sm:$0x3]
      %v825 = vsel %vm800, %v788, 0.0
      %v826 = vsel %vm801, %v789, 0.0
      %v827 = vsel %vm802, %v790, 0.0
      %v828 = vsel %vm803, %v791, 0.0
      %v829 = vsel %vm804, %v792, 0.0
      %v830 = vadd.f32 %v820, %v825
      %v831 = vadd.f32 %v821, %v826
      %v832 = vadd.f32 %v822, %v827
      %v833 = vadd.f32 %v823, %v828
      %v834 = vadd.f32 %v824, %v829
      %835 = vst [vmem:[#allocation6] sm:$0x3] %v830
      %836 = vst [vmem:[#allocation6 + $0x2] sm:$0x3] %v831
      %837 = vst [vmem:[#allocation6 + $0x4] sm:$0x3] %v832
      %838 = vst [vmem:[#allocation6 + $0x6] sm:$0x3] %v833
      %839 = vst [vmem:[#allocation6 + $0x8] sm:$0x3] %v834
      %v840 = vld [vmem:[#allocation8] sm:$0x3]
      %v841 = vld [vmem:[#allocation8 + $0x2] sm:$0x3]
      %v842 = vld [vmem:[#allocation8 + $0x4] sm:$0x3]
      %v843 = vld [vmem:[#allocation8 + $0x6] sm:$0x3]
      %v844 = vld [vmem:[#allocation8 + $0x8] sm:$0x3]
      %v845 = vsel %vm800, 1.0, 0.0
      %v846 = vsel %vm801, 1.0, 0.0
      %v847 = vsel %vm802, 1.0, 0.0
      %v848 = vsel %vm803, 1.0, 0.0
      %v849 = vsel %vm804, 1.0, 0.0
      %v850 = vadd.f32 %v840, %v845
      %v851 = vadd.f32 %v841, %v846
      %v852 = vadd.f32 %v842, %v847
      %v853 = vadd.f32 %v843, %v848
      %v854 = vadd.f32 %v844, %v849
      %855 = vst [vmem:[#allocation8] sm:$0x3] %v850
      %856 = vst [vmem:[#allocation8 + $0x2] sm:$0x3] %v851
      %857 = vst [vmem:[#allocation8 + $0x4] sm:$0x3] %v852
      %858 = vst [vmem:[#allocation8 + $0x6] sm:$0x3] %v853
      %859 = vst [vmem:[#allocation8 + $0x8] sm:$0x3] %v854
      %v860 = vld [vmem:[#allocation9] sm:$0x3]
      %v861 = vld [vmem:[#allocation9 + $0x2] sm:$0x3]
      %v862 = vld [vmem:[#allocation9 + $0x4] sm:$0x3]
      %v863 = vld [vmem:[#allocation9 + $0x6] sm:$0x3]
      %v864 = vld [vmem:[#allocation9 + $0x8] sm:$0x3]
      %v865 = vsel %vm800, %v795, 0.0
      %v866 = vsel %vm801, %v796, 0.0
      %v867 = vsel %vm802, %v797, 0.0
      %v868 = vsel %vm803, %v798, 0.0
      %v869 = vsel %vm804, %v799, 0.0
      %v870 = vadd.f32 %v860, %v865
      %v871 = vadd.f32 %v861, %v866
      %v872 = vadd.f32 %v862, %v867
      %v873 = vadd.f32 %v863, %v868
      %v874 = vadd.f32 %v864, %v869
      %875 = vst [vmem:[#allocation9] sm:$0x3] %v870
      %876 = vst [vmem:[#allocation9 + $0x2] sm:$0x3] %v871
      %877 = vst [vmem:[#allocation9 + $0x4] sm:$0x3] %v872
      %878 = vst [vmem:[#allocation9 + $0x6] sm:$0x3] %v873
      %879 = vst [vmem:[#allocation9 + $0x8] sm:$0x3] %v874
      %v880 = vld [vmem:[%s591] sm:$0x3]
      %v881 = vld [vmem:[%s591 + $0x2] sm:$0x3]
      %v882 = vtanh.pop %v880
      %v883 = vtanh.pop %v881
      %v884 = vld [vmem:[%s605] sm:$0x3]
      %v885 = vld [vmem:[%s605 + $0x2] sm:$0x3]
      %v886 = vsub.f32 %v882, %v884
      %v887 = vsub.f32 %v883, %v885
      %v888 = vmul.f32 %v886, %v886
      %v889 = vmul.f32 %v887, %v887
      %v890 = vld [vmem:[#allocation10] sm:$0x3]
      %v891 = vsel %vm696, %v888, 0.0
      %v892 = vsel %vm696, %v889, 0.0
      %v893 = vadd.f32 %v891, %v892
      %v894 = vadd.f32 %v890, %v893
      %895 = vst [vmem:[#allocation10] sm:$0x3] %v894
      // Predicated region
      $region49: #{hover_loss.1} parent=43 // pred_check
        %p896 = pneg %p660
      $region50: #{hover_loss.1} parent=43 // pred_check_branch
        %898 = sbr.rel (%p896) target = $region52
      $region51: #{hover_loss.1} parent=43 // pred_region
        %v899 = vld [vmem:[#allocation2] sm:$0x3]
        %v900 = vld [vmem:[#allocation2 + $0x2] sm:$0x3]
        %v901 = vsel %vm696, %v899, 0.0
        %v902 = vrot.slane %v901, 4
        %v903 = vadd.f32 %v901, %v902
        %v904 = vrot.slane %v903, 2
        %v905 = vadd.f32 %v903, %v904
        %v906 = vrot.slane %v905, 1
        %v907 = vadd.f32 %v905, %v906
        %v908 = vsel %vm696, %v900, 0.0
        %v909 = vrot.slane %v908, 4
        %v910 = vadd.f32 %v908, %v909
        %v911 = vrot.slane %v910, 2
        %v912 = vadd.f32 %v910, %v911
        %v913 = vrot.slane %v912, 1
        %v914 = vadd.f32 %v912, %v913
        %vm917 = vcmask 1041409
        %v918 = vsel %vm917, %v914, %v907
        %920 = vst [vmem:[%s644] sm:$0x3] %v918
        %v921 = vld [vmem:[#allocation3] sm:$0x3]
        %v922 = vld [vmem:[#allocation3 + $0x2] sm:$0x3]
        %v923 = vsel %vm696, %v921, 0.0
        %v924 = vrot.slane %v923, 4
        %v925 = vadd.f32 %v923, %v924
        %v926 = vrot.slane %v925, 2
        %v927 = vadd.f32 %v925, %v926
        %v928 = vrot.slane %v927, 1
        %v929 = vadd.f32 %v927, %v928
        %v930 = vsel %vm696, %v922, 0.0
        %v931 = vrot.slane %v930, 4
        %v932 = vadd.f32 %v930, %v931
        %v933 = vrot.slane %v932, 2
        %v934 = vadd.f32 %v932, %v933
        %v935 = vrot.slane %v934, 1
        %v936 = vadd.f32 %v934, %v935
        %v939 = vsel %vm917, %v936, %v929
        %s941 = scalar_lea.vmem %s644, 2
        %942 = vst [vmem:[%s941] sm:$0x3] %v939
        %v943 = vld [vmem:[#allocation4] sm:$0x3]
        %v944 = vld [vmem:[#allocation4 + $0x2] sm:$0x3]
        %v945 = vsel %vm696, %v943, 0.0
        %v946 = vrot.slane %v945, 4
        %v947 = vadd.f32 %v945, %v946
        %v948 = vrot.slane %v947, 2
        %v949 = vadd.f32 %v947, %v948
        %v950 = vrot.slane %v949, 1
        %v951 = vadd.f32 %v949, %v950
        %v952 = vsel %vm696, %v944, 0.0
        %v953 = vrot.slane %v952, 4
        %v954 = vadd.f32 %v952, %v953
        %v955 = vrot.slane %v954, 2
        %v956 = vadd.f32 %v954, %v955
        %v957 = vrot.slane %v956, 1
        %v958 = vadd.f32 %v956, %v957
        %v961 = vsel %vm917, %v958, %v951
        %s963 = scalar_lea.vmem %s644, 4
        %964 = vst [vmem:[%s963] sm:$0x3] %v961
        %v965 = vld [vmem:[#allocation5] sm:$0x3]
        %v966 = vld [vmem:[#allocation5 + $0x2] sm:$0x3]
        %v967 = vsel %vm696, %v965, 0.0
        %v968 = vrot.slane %v967, 4
        %v969 = vadd.f32 %v967, %v968
        %v970 = vrot.slane %v969, 2
        %v971 = vadd.f32 %v969, %v970
        %v972 = vrot.slane %v971, 1
        %v973 = vadd.f32 %v971, %v972
        %v974 = vsel %vm696, %v966, 0.0
        %v975 = vrot.slane %v974, 4
        %v976 = vadd.f32 %v974, %v975
        %v977 = vrot.slane %v976, 2
        %v978 = vadd.f32 %v976, %v977
        %v979 = vrot.slane %v978, 1
        %v980 = vadd.f32 %v978, %v979
        %v983 = vsel %vm917, %v980, %v973
        %s985 = scalar_lea.vmem %s644, 6
        %986 = vst [vmem:[%s985] sm:$0x3] %v983
        %v987 = vld [vmem:[#allocation6] sm:$0x3]
        %v988 = vld [vmem:[#allocation6 + $0x2] sm:$0x3]
        %v989 = vld [vmem:[#allocation6 + $0x4] sm:$0x3]
        %v990 = vld [vmem:[#allocation6 + $0x6] sm:$0x3]
        %v991 = vld [vmem:[#allocation6 + $0x8] sm:$0x3]
        %v992 = vsel %vm696, %v987, 0.0
        %v993 = vrot.slane %v992, 4
        %v994 = vadd.f32 %v992, %v993
        %v995 = vrot.slane %v994, 2
        %v996 = vadd.f32 %v994, %v995
        %v997 = vrot.slane %v996, 1
        %v998 = vadd.f32 %v996, %v997
        %v999 = vsel %vm696, %v988, 0.0
        %v1000 = vrot.slane %v999, 4
        %v1001 = vadd.f32 %v999, %v1000
        %v1002 = vrot.slane %v1001, 2
        %v1003 = vadd.f32 %v1001, %v1002
        %v1004 = vrot.slane %v1003, 1
        %v1005 = vadd.f32 %v1003, %v1004
        %v1006 = vsel %vm696, %v989, 0.0
        %v1007 = vrot.slane %v1006, 4
        %v1008 = vadd.f32 %v1006, %v1007
        %v1009 = vrot.slane %v1008, 2
        %v1010 = vadd.f32 %v1008, %v1009
        %v1011 = vrot.slane %v1010, 1
        %v1012 = vadd.f32 %v1010, %v1011
        %v1013 = vsel %vm696, %v990, 0.0
        %v1014 = vrot.slane %v1013, 4
        %v1015 = vadd.f32 %v1013, %v1014
        %v1016 = vrot.slane %v1015, 2
        %v1017 = vadd.f32 %v1015, %v1016
        %v1018 = vrot.slane %v1017, 1
        %v1019 = vadd.f32 %v1017, %v1018
        %v1020 = vsel %vm696, %v991, 0.0
        %v1021 = vrot.slane %v1020, 4
        %v1022 = vadd.f32 %v1020, %v1021
        %v1023 = vrot.slane %v1022, 2
        %v1024 = vadd.f32 %v1022, %v1023
        %v1025 = vrot.slane %v1024, 1
        %v1026 = vadd.f32 %v1024, %v1025
        %v1032 = vsel %vm917, %v1005, %v998
        %vm1033 = vcmask 1042434
        %v1034 = vsel %vm1033, %v1012, %v1032
        %vm1035 = vcmask 1043459
        %v1036 = vsel %vm1035, %v1019, %v1034
        %vm1037 = vcmask 1044484
        %v1038 = vsel %vm1037, %v1026, %v1036
        %1040 = vst [vmem:[%s659] sm:$0x1f] %v1038
        %v1041 = vld [vmem:[#allocation7] sm:$0x3]
        %v1042 = vld [vmem:[#allocation7 + $0x2] sm:$0x3]
        %v1043 = vld [vmem:[#allocation7 + $0x4] sm:$0x3]
        %v1044 = vld [vmem:[#allocation7 + $0x6] sm:$0x3]
        %v1045 = vld [vmem:[#allocation7 + $0x8] sm:$0x3]
        %v1046 = vsel %vm696, %v1041, 0.0
        %v1047 = vrot.slane %v1046, 4
        %v1048 = vadd.f32 %v1046, %v1047
        %v1049 = vrot.slane %v1048, 2
        %v1050 = vadd.f32 %v1048, %v1049
        %v1051 = vrot.slane %v1050, 1
        %v1052 = vadd.f32 %v1050, %v1051
        %v1053 = vsel %vm696, %v1042, 0.0
        %v1054 = vrot.slane %v1053, 4
        %v1055 = vadd.f32 %v1053, %v1054
        %v1056 = vrot.slane %v1055, 2
        %v1057 = vadd.f32 %v1055, %v1056
        %v1058 = vrot.slane %v1057, 1
        %v1059 = vadd.f32 %v1057, %v1058
        %v1060 = vsel %vm696, %v1043, 0.0
        %v1061 = vrot.slane %v1060, 4
        %v1062 = vadd.f32 %v1060, %v1061
        %v1063 = vrot.slane %v1062, 2
        %v1064 = vadd.f32 %v1062, %v1063
        %v1065 = vrot.slane %v1064, 1
        %v1066 = vadd.f32 %v1064, %v1065
        %v1067 = vsel %vm696, %v1044, 0.0
        %v1068 = vrot.slane %v1067, 4
        %v1069 = vadd.f32 %v1067, %v1068
        %v1070 = vrot.slane %v1069, 2
        %v1071 = vadd.f32 %v1069, %v1070
        %v1072 = vrot.slane %v1071, 1
        %v1073 = vadd.f32 %v1071, %v1072
        %v1074 = vsel %vm696, %v1045, 0.0
        %v1075 = vrot.slane %v1074, 4
        %v1076 = vadd.f32 %v1074, %v1075
        %v1077 = vrot.slane %v1076, 2
        %v1078 = vadd.f32 %v1076, %v1077
        %v1079 = vrot.slane %v1078, 1
        %v1080 = vadd.f32 %v1078, %v1079
        %v1086 = vsel %vm917, %v1059, %v1052
        %v1087 = vsel %vm1033, %v1066, %v1086
        %v1088 = vsel %vm1035, %v1073, %v1087
        %v1089 = vsel %vm1037, %v1080, %v1088
        %s1091 = scalar_lea.vmem %s659, 8
        %1092 = vst [vmem:[%s1091] sm:$0x1f] %v1089
        %v1093 = vld [vmem:[#allocation8] sm:$0x3]
        %v1094 = vld [vmem:[#allocation8 + $0x2] sm:$0x3]
        %v1095 = vld [vmem:[#allocation8 + $0x4] sm:$0x3]
        %v1096 = vld [vmem:[#allocation8 + $0x6] sm:$0x3]
        %v1097 = vld [vmem:[#allocation8 + $0x8] sm:$0x3]
        %v1098 = vsel %vm696, %v1093, 0.0
        %v1099 = vrot.slane %v1098, 4
        %v1100 = vadd.f32 %v1098, %v1099
        %v1101 = vrot.slane %v1100, 2
        %v1102 = vadd.f32 %v1100, %v1101
        %v1103 = vrot.slane %v1102, 1
        %v1104 = vadd.f32 %v1102, %v1103
        %v1105 = vsel %vm696, %v1094, 0.0
        %v1106 = vrot.slane %v1105, 4
        %v1107 = vadd.f32 %v1105, %v1106
        %v1108 = vrot.slane %v1107, 2
        %v1109 = vadd.f32 %v1107, %v1108
        %v1110 = vrot.slane %v1109, 1
        %v1111 = vadd.f32 %v1109, %v1110
        %v1112 = vsel %vm696, %v1095, 0.0
        %v1113 = vrot.slane %v1112, 4
        %v1114 = vadd.f32 %v1112, %v1113
        %v1115 = vrot.slane %v1114, 2
        %v1116 = vadd.f32 %v1114, %v1115
        %v1117 = vrot.slane %v1116, 1
        %v1118 = vadd.f32 %v1116, %v1117
        %v1119 = vsel %vm696, %v1096, 0.0
        %v1120 = vrot.slane %v1119, 4
        %v1121 = vadd.f32 %v1119, %v1120
        %v1122 = vrot.slane %v1121, 2
        %v1123 = vadd.f32 %v1121, %v1122
        %v1124 = vrot.slane %v1123, 1
        %v1125 = vadd.f32 %v1123, %v1124
        %v1126 = vsel %vm696, %v1097, 0.0
        %v1127 = vrot.slane %v1126, 4
        %v1128 = vadd.f32 %v1126, %v1127
        %v1129 = vrot.slane %v1128, 2
        %v1130 = vadd.f32 %v1128, %v1129
        %v1131 = vrot.slane %v1130, 1
        %v1132 = vadd.f32 %v1130, %v1131
        %v1138 = vsel %vm917, %v1111, %v1104
        %v1139 = vsel %vm1033, %v1118, %v1138
        %v1140 = vsel %vm1035, %v1125, %v1139
        %v1141 = vsel %vm1037, %v1132, %v1140
        %s1143 = scalar_lea.vmem %s659, 16
        %1144 = vst [vmem:[%s1143] sm:$0x1f] %v1141
        %v1145 = vld [vmem:[#allocation9] sm:$0x3]
        %v1146 = vld [vmem:[#allocation9 + $0x2] sm:$0x3]
        %v1147 = vld [vmem:[#allocation9 + $0x4] sm:$0x3]
        %v1148 = vld [vmem:[#allocation9 + $0x6] sm:$0x3]
        %v1149 = vld [vmem:[#allocation9 + $0x8] sm:$0x3]
        %v1150 = vsel %vm696, %v1145, 0.0
        %v1151 = vrot.slane %v1150, 4
        %v1152 = vadd.f32 %v1150, %v1151
        %v1153 = vrot.slane %v1152, 2
        %v1154 = vadd.f32 %v1152, %v1153
        %v1155 = vrot.slane %v1154, 1
        %v1156 = vadd.f32 %v1154, %v1155
        %v1157 = vsel %vm696, %v1146, 0.0
        %v1158 = vrot.slane %v1157, 4
        %v1159 = vadd.f32 %v1157, %v1158
        %v1160 = vrot.slane %v1159, 2
        %v1161 = vadd.f32 %v1159, %v1160
        %v1162 = vrot.slane %v1161, 1
        %v1163 = vadd.f32 %v1161, %v1162
        %v1164 = vsel %vm696, %v1147, 0.0
        %v1165 = vrot.slane %v1164, 4
        %v1166 = vadd.f32 %v1164, %v1165
        %v1167 = vrot.slane %v1166, 2
        %v1168 = vadd.f32 %v1166, %v1167
        %v1169 = vrot.slane %v1168, 1
        %v1170 = vadd.f32 %v1168, %v1169
        %v1171 = vsel %vm696, %v1148, 0.0
        %v1172 = vrot.slane %v1171, 4
        %v1173 = vadd.f32 %v1171, %v1172
        %v1174 = vrot.slane %v1173, 2
        %v1175 = vadd.f32 %v1173, %v1174
        %v1176 = vrot.slane %v1175, 1
        %v1177 = vadd.f32 %v1175, %v1176
        %v1178 = vsel %vm696, %v1149, 0.0
        %v1179 = vrot.slane %v1178, 4
        %v1180 = vadd.f32 %v1178, %v1179
        %v1181 = vrot.slane %v1180, 2
        %v1182 = vadd.f32 %v1180, %v1181
        %v1183 = vrot.slane %v1182, 1
        %v1184 = vadd.f32 %v1182, %v1183
        %v1190 = vsel %vm917, %v1163, %v1156
        %v1191 = vsel %vm1033, %v1170, %v1190
        %v1192 = vsel %vm1035, %v1177, %v1191
        %v1193 = vsel %vm1037, %v1184, %v1192
        %s1195 = scalar_lea.vmem %s659, 24
        %1196 = vst [vmem:[%s1195] sm:$0x1f] %v1193
        %v1197 = vld [vmem:[#allocation10] sm:$0x3]
        %v1198 = vsel %vm696, %v1197, 0.0
        %v1199 = vrot.slane %v1198, 4
        %v1200 = vadd.f32 %v1198, %v1199
        %v1201 = vrot.slane %v1200, 2
        %v1202 = vadd.f32 %v1200, %v1201
        %v1203 = vrot.slane %v1202, 1
        %v1204 = vadd.f32 %v1202, %v1203
        %1205 = vst [vmem:[%s650] sm:$0x1] %v1204
      $region52: #{hover_loss.1} parent=43 // pred_fallthru
        _
      %p1206 = scmp.lt.s32.totalorder %s25, 1
      %s1207 = scalar_select %p1206, %s25, 1
      %p1208 = scmp.lt.s32.totalorder %s26, 0
      %s1209 = scalar_select %p1208, %s26, 0
      %s1210 = smul.addr %s1209, 4
      %s1211 = smul.addr %s1207, 4
      %s1212 = sadd.s32 %s1210, %s1211
      %s1213 = smul.addr %s1212, 2
      %s1214 = scalar_lea.vmem %s6, %s1213
      %p1215 = scmp.lt.s32.totalorder %s25, 1
      %s1216 = scalar_select %p1215, %s25, 1
      %p1217 = scmp.lt.s32.totalorder %s26, 0
      %s1218 = scalar_select %p1217, %s26, 0
      %s1219 = sadd.s32 %s1218, %s1216
      %s1220 = scalar_lea.vmem %s7, %s1219
      %p1221 = scmp.lt.s32.totalorder %s25, 1
      %s1222 = scalar_select %p1221, %s25, 1
      %p1223 = scmp.lt.s32.totalorder %s26, 0
      %s1224 = scalar_select %p1223, %s26, 0
      %s1225 = smul.addr %s1224, 4
      %s1226 = smul.addr %s1222, 4
      %s1227 = sadd.s32 %s1225, %s1226
      %s1228 = smul.addr %s1227, 8
      %s1229 = scalar_lea.vmem %s8, %s1228
      // Predicated region
      $region53: #{hover_loss.1} parent=43 // pred_check
        %p1230 = pneg %p263
      $region54: #{hover_loss.1} parent=43 // pred_check_branch
        %1232 = sbr.rel (%p1230) target = $region56
      $region55: #{hover_loss.1} parent=43 // pred_region
        _
      $region56: #{hover_loss.1} parent=43 // pred_fallthru
        _
      // Predicated region
      $region57: #{hover_loss.1} parent=43 // pred_check
        %p1233 = pneg %p291
      $region58: #{hover_loss.1} parent=43 // pred_check_branch
        %1235 = sbr.rel (%p1233) target = $region60
      $region59: #{hover_loss.1} parent=43 // pred_region
        _
      $region60: #{hover_loss.1} parent=43 // pred_fallthru
        _
      // Predicated region
      $region61: #{hover_loss.1} parent=43 // pred_check
        %p1236 = pneg %p319
      $region62: #{hover_loss.1} parent=43 // pred_check_branch
        %1238 = sbr.rel (%p1236) target = $region64
      $region63: #{hover_loss.1} parent=43 // pred_region
        _
      $region64: #{hover_loss.1} parent=43 // pred_fallthru
        _
    $region44: #{hover_loss.1} parent=5 // pred_fallthru
      _
    %p1239 = scmp.le.s32.totalorder 2, %s15
    // Predicated region
    $region65: #{hover_loss.1} parent=5 // pred_check
      %p1240 = pneg %p1239
    $region66: #{hover_loss.1} parent=5 // pred_check_branch
      %1242 = sbr.rel (%p1240) target = $region68
    $region67: #{hover_loss.1} parent=5 // pred_region
      %s1243 = ssub.s32 %s15, 2
      // Predicated region
      $region69: #{hover_loss.1} parent=67 // pred_check
        %p1244 = pneg %p269
      $region70: #{hover_loss.1} parent=67 // pred_check_branch
        %1246 = sbr.rel (%p1244) target = $region72
      $region71: #{hover_loss.1} parent=67 // pred_region
        %p1247 = scmp.lt.s32.totalorder %s28, 1
        %s1248 = scalar_select %p1247, %s28, 1
        %p1249 = scmp.lt.s32.totalorder %s29, 0
        %s1250 = scalar_select %p1249, %s29, 0
        %s1251 = smul.addr %s1250, 4
        %s1252 = smul.addr %s1248, 4
        %s1253 = sadd.s32 %s1251, %s1252
        %s1254 = smul.addr %s1253, 2
        %s1255 = scalar_lea.vmem %s6, %s1254
      $region72: #{hover_loss.1} parent=67 // pred_fallthru
        _
      // Predicated region
      $region73: #{hover_loss.1} parent=67 // pred_check
        %p1256 = pneg %p297
      $region74: #{hover_loss.1} parent=67 // pred_check_branch
        %1258 = sbr.rel (%p1256) target = $region76
      $region75: #{hover_loss.1} parent=67 // pred_region
        %p1259 = scmp.lt.s32.totalorder %s28, 1
        %s1260 = scalar_select %p1259, %s28, 1
        %p1261 = scmp.lt.s32.totalorder %s29, 0
        %s1262 = scalar_select %p1261, %s29, 0
        %s1263 = sadd.s32 %s1262, %s1260
        %s1264 = scalar_lea.vmem %s7, %s1263
      $region76: #{hover_loss.1} parent=67 // pred_fallthru
        _
      // Predicated region
      $region77: #{hover_loss.1} parent=67 // pred_check
        %p1265 = pneg %p325
      $region78: #{hover_loss.1} parent=67 // pred_check_branch
        %1267 = sbr.rel (%p1265) target = $region80
      $region79: #{hover_loss.1} parent=67 // pred_region
        %p1268 = scmp.lt.s32.totalorder %s28, 1
        %s1269 = scalar_select %p1268, %s28, 1
        %p1270 = scmp.lt.s32.totalorder %s29, 0
        %s1271 = scalar_select %p1270, %s29, 0
        %s1272 = smul.addr %s1271, 4
        %s1273 = smul.addr %s1269, 4
        %s1274 = sadd.s32 %s1272, %s1273
        %s1275 = smul.addr %s1274, 8
        %s1276 = scalar_lea.vmem %s8, %s1275
      $region80: #{hover_loss.1} parent=67 // pred_fallthru
        _
    $region68: #{hover_loss.1} parent=5 // pred_fallthru
      _
  $region6: #{hover_loss.1} parent=0 // loop_footer
    %s19 = sadd.s32 1, %s15
  $region7: #{hover_loss.1} parent=0 // loop_footer_branch
    %14 = sbr.rel target = $region3
  $region8: #{hover_loss.1} parent=0 // loop_exit
    _

</llo_original>
